<compile_context>
chip_gen: v6e
topology: v6e:2x2x1
jax: 0.10.0
libtpu: 0.0.40
codegen_flags: <defaults>
</compile_context>

<pallas_src>
import functools

import jax
import jax.numpy as jnp
from jax import lax
from jax.experimental import pallas as pl
from jax.experimental.pallas import tpu as pltpu


def encoder_kernel(p1_ref, w1_ref, w2_ref, b2_ref, o_ref, h_ref, *, H, W):
    """Fused Conv1 -> ReLU -> Conv2 for one image.

    Layout: channels on sublanes, flattened padded pixels on lanes.
      p1_ref: (1, 16, M1)  conv1 im2col, M1 = H*(W+2).  Rows 0..8 = the 9 taps
              (halo columns pre-zeroed), row 9 = interior mask (carries bias),
              rows 10..15 = 0.
      w1_ref: (C1, 16)     conv1 weights; column t = dy*3+dx, column 9 = bias.
      w2_ref: (9, C2, C1)  conv2 weights per tap.
      b2_ref: (C2, 1)
      o_ref : (1, C2, M1)  output, NCHW order over padded-x pixel columns.
      h_ref : (C1, Mbuf)   scratch; column p = padded pixel p = i*(W+2)+j.
    """
    Wp = W + 2
    M1 = H * Wp
    C1 = w1_ref.shape[0]
    Mbuf = h_ref.shape[1]

    # ---- conv1: one (C1,16)x(16,M1) MXU dot.  Bias + halo mask are folded
    # into patch row 9, so halo columns of h1 are exactly zero after ReLU. ----
    h1 = jnp.maximum(
        jnp.dot(w1_ref[...], p1_ref[0], preferred_element_type=jnp.float32),
        0.0)                                                     # (C1, M1)

    # ---- refresh only the scratch halo (top padded row / bottom rows + tail);
    # the interior [Wp, Wp+M1) is fully overwritten below, every step. ----
    h_ref[:, 0:Wp] = jnp.zeros((C1, Wp), jnp.float32)
    h_ref[:, Wp + M1:Mbuf] = jnp.zeros((C1, Mbuf - (Wp + M1)), jnp.float32)
    h_ref[:, Wp:Wp + M1] = h1

    # ---- conv2: nine accumulating MXU dots.  Each tap is a static
    # column-offset slice of the scratch (no reshape / concat / transpose). ----
    acc = jnp.dot(w2_ref[0], h_ref[:, 0:M1],
                  preferred_element_type=jnp.float32)            # (C2, M1)
    for t in range(1, 9):
        dy, dx = divmod(t, 3)
        s = dy * Wp + dx
        acc = acc + jnp.dot(w2_ref[t], h_ref[:, s:s + M1],
                            preferred_element_type=jnp.float32)

    o_ref[0] = (acc + b2_ref[...]).astype(o_ref.dtype)


def encoder_forward(img_nchw, params):
    """Matches Encoder.forward: Conv(1->48,3,p=1) -> ReLU -> Conv(48->fd,3,p=1)."""
    N, Cin, H, W = img_nchw.shape
    assert Cin == 1, "Encoder expects a single input channel"
    C1 = params["b1"].shape[0]
    C2 = params["b2"].shape[0]

    Wp = W + 2
    M1 = H * Wp                                  # interior rows of padded grid
    read_extent = M1 + 2 * Wp + 2                # furthest scratch column read
    Mbuf = -(-read_extent // 128) * 128          # round up to full lane tiles

    # conv1 im2col in padded-x pixel space, lane-dense (lane dim = M1).
    xpad2 = jnp.pad(img_nchw[:, 0], ((0, 0), (1, 1), (2, 2)))    # (N, H+2, W+4)
    taps = [xpad2[:, dy:dy + H, dx:dx + Wp].reshape(N, M1)
            for dy in range(3) for dx in range(3)]
    col = jnp.arange(M1, dtype=jnp.int32) % Wp
    interior = ((col >= 1) & (col <= W)).astype(img_nchw.dtype)  # (M1,)
    rows = ([t * interior for t in taps]                 # zero halo columns
            + [jnp.broadcast_to(interior, (N, M1))]      # bias / mask row
            + [jnp.zeros((N, M1), img_nchw.dtype)] * 6)  # pad taps 10 -> 16
    p1 = jnp.stack(rows, axis=1)                                 # (N, 16, M1)

    # conv1 weights with the bias as an extra column (matches p1 row 9).
    w1k = jnp.concatenate(
        [params["w1_oihw"].reshape(C1, 9),
         params["b1"].reshape(C1, 1),
         jnp.zeros((C1, 6), params["w1_oihw"].dtype)], axis=1)   # (C1, 16)

    # conv2 weights per tap: (tap, out_ch, in_ch), tap index = dy*3+dx.
    w2k = jnp.transpose(params["w2_oihw"], (2, 3, 0, 1)).reshape(9, C2, C1)
    b2 = params["b2"].reshape(C2, 1)

    # Honest cost estimate over the *padded* tiles that actually move.
    lane = lambda n: -(-n // 128) * 128
    sub = lambda n: -(-n // 8) * 8
    bytes_accessed = 4 * (
        N * sub(16) * lane(M1)            # p1
        + sub(C1) * lane(16)              # w1k
        + 9 * sub(C2) * lane(C1)          # w2k
        + sub(C2) * lane(1)               # b2
        + N * sub(C2) * lane(M1))         # output
    flops = 2 * N * M1 * (C1 * 16 + 9 * C2 * C1)

    kernel = functools.partial(encoder_kernel, H=H, W=W)
    out = pl.pallas_call(
        kernel,
        out_shape=jax.ShapeDtypeStruct((N, C2, M1), jnp.float32),
        grid=(N,),
        in_specs=[
            pl.BlockSpec((1, 16, M1), lambda n: (n, 0, 0)),
            pl.BlockSpec((C1, 16), lambda n: (0, 0)),
            pl.BlockSpec((9, C2, C1), lambda n: (0, 0, 0)),
            pl.BlockSpec((C2, 1), lambda n: (0, 0)),
        ],
        out_specs=pl.BlockSpec((1, C2, M1), lambda n: (n, 0, 0)),
        scratch_shapes=[pltpu.VMEM((C1, Mbuf), jnp.float32)],
        compiler_params=pltpu.CompilerParams(
            dimension_semantics=("parallel",)),
        cost_estimate=pl.CostEstimate(
            flops=flops, transcendentals=0, bytes_accessed=bytes_accessed),
    )(p1, w1k, w2k, b2)

    # Output columns are y*(W+2)+x; drop the 2 junk x's per row -> NCHW.
    return out.reshape(N, C2, H, Wp)[:, :, :, :W]


def init_params(feature_dim=32):
    """Deterministic synthetic params, PyTorch shapes: OIHW weights, (O,) bias."""
    k = jax.random.PRNGKey(42)
    k1, k2, k3, k4 = jax.random.split(k, 4)
    w1_oihw = jax.random.normal(k1, (48, 1, 3, 3), jnp.float32) * 0.1
    b1 = jax.random.normal(k2, (48,), jnp.float32) * 0.1
    w2_oihw = jax.random.normal(k3, (feature_dim, 48, 3, 3), jnp.float32) * 0.1
    b2 = jax.random.normal(k4, (feature_dim,), jnp.float32) * 0.1
    return dict(w1_oihw=w1_oihw, b1=b1, w2_oihw=w2_oihw, b2=b2)


def encoder_reference(img_nchw, params):
    """Pure-JAX reference (lax conv) for correctness check."""
    dn = ("NCHW", "OIHW", "NCHW")
    h = lax.conv_general_dilated(img_nchw, params["w1_oihw"], (1, 1),
                                 ((1, 1), (1, 1)), dimension_numbers=dn)
    h = jnp.maximum(h + params["b1"][None, :, None, None], 0.0)
    y = lax.conv_general_dilated(h, params["w2_oihw"], (1, 1),
                                 ((1, 1), (1, 1)), dimension_numbers=dn)
    return y + params["b2"][None, :, None, None]


if __name__ == "__main__":
    feature_dim = 32
    params = init_params(feature_dim)

    key = jax.random.PRNGKey(0)
    img = jax.random.normal(key, (2, 1, 16, 16), jnp.float32)   # NCHW, 1 channel

    out = encoder_forward(img, params)
    out = jax.block_until_ready(out)
    assert out.shape == (2, feature_dim, 16, 16), out.shape

    ref = jax.block_until_ready(encoder_reference(img, params))
    assert jnp.allclose(out, ref, atol=1e-4, rtol=1e-4), float(
        jnp.max(jnp.abs(out - ref)))

    print("KERNEL_OK")
</pallas_src>

<mosaic_0001>
module attributes {stable_mosaic.version = 11 : i64} {
  func.func @encoder_kernel(%arg0: i32, %arg1: memref<1x16x288xf32, #tpu.memory_space<vmem>>, %arg2: memref<48x16xf32, #tpu.memory_space<vmem>>, %arg3: memref<9x32x48xf32, #tpu.memory_space<vmem>>, %arg4: memref<32x1xf32, #tpu.memory_space<vmem>>, %arg5: memref<1x32x288xf32, #tpu.memory_space<vmem>>, %arg6: memref<48x384xf32, #tpu.memory_space<vmem>>) attributes {dimension_semantics = [#tpu.dimension_semantics<parallel>], iteration_bounds = array<i64: 2>, scalar_prefetch = 0 : i64, scratch_operands = 1 : i64, tpu.core_type = #tpu.core_type<tc>, window_params = [{transform_indices = @transform_0, window_bounds = array<i64: 1, 16, 288>}, {pipeline_mode = #tpu.pipeline_mode<synchronous>, transform_indices = @transform_1, window_bounds = array<i64: 48, 16>}, {pipeline_mode = #tpu.pipeline_mode<synchronous>, transform_indices = @transform_2, window_bounds = array<i64: 9, 32, 48>}, {pipeline_mode = #tpu.pipeline_mode<synchronous>, transform_indices = @transform_3, window_bounds = array<i64: 32, 1>}, {transform_indices = @transform_4, window_bounds = array<i64: 1, 32, 288>}]} {
    %c0 = arith.constant 0 : index
    %c0_0 = arith.constant 0 : index
    %0 = vector.load %arg2[%c0, %c0_0] : memref<48x16xf32, #tpu.memory_space<vmem>>, vector<48x16xf32>
    %c0_1 = arith.constant 0 : index
    %c0_2 = arith.constant 0 : index
    %c0_3 = arith.constant 0 : index
    %1 = vector.load %arg1[%c0_1, %c0_2, %c0_3] : memref<1x16x288xf32, #tpu.memory_space<vmem>>, vector<1x16x288xf32>
    %2 = vector.shape_cast %1 : vector<1x16x288xf32> to vector<16x288xf32>
    %cst = arith.constant dense<0.000000e+00> : vector<48x288xf32>
    %3 = tpu.matmul %0, %2, %cst {dimension_numbers = #tpu.dot_dimension_numbers<[1], [0], [0], [1], [0, 0, 1, 1], [], []>} : vector<48x16xf32>, vector<16x288xf32>, vector<48x288xf32> -> vector<48x288xf32>
    %cst_4 = arith.constant 0.000000e+00 : f32
    %4 = vector.broadcast %cst_4 : f32 to vector<48x288xf32>
    %5 = arith.maximumf %3, %4 : vector<48x288xf32>
    %cst_5 = arith.constant 0.000000e+00 : f32
    %6 = vector.broadcast %cst_5 : f32 to vector<48x18xf32>
    %c0_6 = arith.constant 0 : index
    %c0_7 = arith.constant 0 : index
    %7 = vector.load %arg6[%c0_6, %c0_7] : memref<48x384xf32, #tpu.memory_space<vmem>>, vector<48x18xf32>
    tpu.vector_store %arg6[%c0_6, %c0_7], %6 {strides = array<i32>} : memref<48x384xf32, #tpu.memory_space<vmem>>, vector<48x18xf32>,
    %cst_8 = arith.constant 0.000000e+00 : f32
    %8 = vector.broadcast %cst_8 : f32 to vector<48x78xf32>
    %c0_9 = arith.constant 0 : index
    %c306 = arith.constant 306 : index
    %9 = vector.load %arg6[%c0_9, %c306] : memref<48x384xf32, #tpu.memory_space<vmem>>, vector<48x78xf32>
    tpu.vector_store %arg6[%c0_9, %c306], %8 {strides = array<i32>} : memref<48x384xf32, #tpu.memory_space<vmem>>, vector<48x78xf32>,
    %c0_10 = arith.constant 0 : index
    %c18 = arith.constant 18 : index
    %10 = vector.load %arg6[%c0_10, %c18] : memref<48x384xf32, #tpu.memory_space<vmem>>, vector<48x288xf32>
    tpu.vector_store %arg6[%c0_10, %c18], %5 {strides = array<i32>} : memref<48x384xf32, #tpu.memory_space<vmem>>, vector<48x288xf32>,
    %c0_11 = arith.constant 0 : index
    %c0_12 = arith.constant 0 : index
    %c0_13 = arith.constant 0 : index
    %11 = vector.load %arg3[%c0_11, %c0_12, %c0_13] : memref<9x32x48xf32, #tpu.memory_space<vmem>>, vector<1x32x48xf32>
    %12 = vector.shape_cast %11 : vector<1x32x48xf32> to vector<32x48xf32>
    %c0_14 = arith.constant 0 : index
    %c0_15 = arith.constant 0 : index
    %13 = vector.load %arg6[%c0_14, %c0_15] : memref<48x384xf32, #tpu.memory_space<vmem>>, vector<48x288xf32>
    %cst_16 = arith.constant dense<0.000000e+00> : vector<32x288xf32>
    %14 = tpu.matmul %12, %13, %cst_16 {dimension_numbers = #tpu.dot_dimension_numbers<[1], [0], [0], [1], [0, 0, 1, 1], [], []>} : vector<32x48xf32>, vector<48x288xf32>, vector<32x288xf32> -> vector<32x288xf32>
    %c1 = arith.constant 1 : index
    %c0_17 = arith.constant 0 : index
    %c0_18 = arith.constant 0 : index
    %15 = vector.load %arg3[%c1, %c0_17, %c0_18] : memref<9x32x48xf32, #tpu.memory_space<vmem>>, vector<1x32x48xf32>
    %16 = vector.shape_cast %15 : vector<1x32x48xf32> to vector<32x48xf32>
    %c0_19 = arith.constant 0 : index
    %c1_20 = arith.constant 1 : index
    %17 = vector.load %arg6[%c0_19, %c1_20] : memref<48x384xf32, #tpu.memory_space<vmem>>, vector<48x288xf32>
    %cst_21 = arith.constant dense<0.000000e+00> : vector<32x288xf32>
    %18 = tpu.matmul %16, %17, %cst_21 {dimension_numbers = #tpu.dot_dimension_numbers<[1], [0], [0], [1], [0, 0, 1, 1], [], []>} : vector<32x48xf32>, vector<48x288xf32>, vector<32x288xf32> -> vector<32x288xf32>
    %19 = arith.addf %14, %18 : vector<32x288xf32>
    %c2 = arith.constant 2 : index
    %c0_22 = arith.constant 0 : index
    %c0_23 = arith.constant 0 : index
    %20 = vector.load %arg3[%c2, %c0_22, %c0_23] : memref<9x32x48xf32, #tpu.memory_space<vmem>>, vector<1x32x48xf32>
    %21 = vector.shape_cast %20 : vector<1x32x48xf32> to vector<32x48xf32>
    %c0_24 = arith.constant 0 : index
    %c2_25 = arith.constant 2 : index
    %22 = vector.load %arg6[%c0_24, %c2_25] : memref<48x384xf32, #tpu.memory_space<vmem>>, vector<48x288xf32>
    %cst_26 = arith.constant dense<0.000000e+00> : vector<32x288xf32>
    %23 = tpu.matmul %21, %22, %cst_26 {dimension_numbers = #tpu.dot_dimension_numbers<[1], [0], [0], [1], [0, 0, 1, 1], [], []>} : vector<32x48xf32>, vector<48x288xf32>, vector<32x288xf32> -> vector<32x288xf32>
    %24 = arith.addf %19, %23 : vector<32x288xf32>
    %c3 = arith.constant 3 : index
    %c0_27 = arith.constant 0 : index
    %c0_28 = arith.constant 0 : index
    %25 = vector.load %arg3[%c3, %c0_27, %c0_28] : memref<9x32x48xf32, #tpu.memory_space<vmem>>, vector<1x32x48xf32>
    %26 = vector.shape_cast %25 : vector<1x32x48xf32> to vector<32x48xf32>
    %c0_29 = arith.constant 0 : index
    %c18_30 = arith.constant 18 : index
    %27 = vector.load %arg6[%c0_29, %c18_30] : memref<48x384xf32, #tpu.memory_space<vmem>>, vector<48x288xf32>
    %cst_31 = arith.constant dense<0.000000e+00> : vector<32x288xf32>
    %28 = tpu.matmul %26, %27, %cst_31 {dimension_numbers = #tpu.dot_dimension_numbers<[1], [0], [0], [1], [0, 0, 1, 1], [], []>} : vector<32x48xf32>, vector<48x288xf32>, vector<32x288xf32> -> vector<32x288xf32>
    %29 = arith.addf %24, %28 : vector<32x288xf32>
    %c4 = arith.constant 4 : index
    %c0_32 = arith.constant 0 : index
    %c0_33 = arith.constant 0 : index
    %30 = vector.load %arg3[%c4, %c0_32, %c0_33] : memref<9x32x48xf32, #tpu.memory_space<vmem>>, vector<1x32x48xf32>
    %31 = vector.shape_cast %30 : vector<1x32x48xf32> to vector<32x48xf32>
    %c0_34 = arith.constant 0 : index
    %c19 = arith.constant 19 : index
    %32 = vector.load %arg6[%c0_34, %c19] : memref<48x384xf32, #tpu.memory_space<vmem>>, vector<48x288xf32>
    %cst_35 = arith.constant dense<0.000000e+00> : vector<32x288xf32>
    %33 = tpu.matmul %31, %32, %cst_35 {dimension_numbers = #tpu.dot_dimension_numbers<[1], [0], [0], [1], [0, 0, 1, 1], [], []>} : vector<32x48xf32>, vector<48x288xf32>, vector<32x288xf32> -> vector<32x288xf32>
    %34 = arith.addf %29, %33 : vector<32x288xf32>
    %c5 = arith.constant 5 : index
    %c0_36 = arith.constant 0 : index
    %c0_37 = arith.constant 0 : index
    %35 = vector.load %arg3[%c5, %c0_36, %c0_37] : memref<9x32x48xf32, #tpu.memory_space<vmem>>, vector<1x32x48xf32>
    %36 = vector.shape_cast %35 : vector<1x32x48xf32> to vector<32x48xf32>
    %c0_38 = arith.constant 0 : index
    %c20 = arith.constant 20 : index
    %37 = vector.load %arg6[%c0_38, %c20] : memref<48x384xf32, #tpu.memory_space<vmem>>, vector<48x288xf32>
    %cst_39 = arith.constant dense<0.000000e+00> : vector<32x288xf32>
    %38 = tpu.matmul %36, %37, %cst_39 {dimension_numbers = #tpu.dot_dimension_numbers<[1], [0], [0], [1], [0, 0, 1, 1], [], []>} : vector<32x48xf32>, vector<48x288xf32>, vector<32x288xf32> -> vector<32x288xf32>
    %39 = arith.addf %34, %38 : vector<32x288xf32>
    %c6 = arith.constant 6 : index
    %c0_40 = arith.constant 0 : index
    %c0_41 = arith.constant 0 : index
    %40 = vector.load %arg3[%c6, %c0_40, %c0_41] : memref<9x32x48xf32, #tpu.memory_space<vmem>>, vector<1x32x48xf32>
    %41 = vector.shape_cast %40 : vector<1x32x48xf32> to vector<32x48xf32>
    %c0_42 = arith.constant 0 : index
    %c36 = arith.constant 36 : index
    %42 = vector.load %arg6[%c0_42, %c36] : memref<48x384xf32, #tpu.memory_space<vmem>>, vector<48x288xf32>
    %cst_43 = arith.constant dense<0.000000e+00> : vector<32x288xf32>
    %43 = tpu.matmul %41, %42, %cst_43 {dimension_numbers = #tpu.dot_dimension_numbers<[1], [0], [0], [1], [0, 0, 1, 1], [], []>} : vector<32x48xf32>, vector<48x288xf32>, vector<32x288xf32> -> vector<32x288xf32>
    %44 = arith.addf %39, %43 : vector<32x288xf32>
    %c7 = arith.constant 7 : index
    %c0_44 = arith.constant 0 : index
    %c0_45 = arith.constant 0 : index
    %45 = vector.load %arg3[%c7, %c0_44, %c0_45] : memref<9x32x48xf32, #tpu.memory_space<vmem>>, vector<1x32x48xf32>
    %46 = vector.shape_cast %45 : vector<1x32x48xf32> to vector<32x48xf32>
    %c0_46 = arith.constant 0 : index
    %c37 = arith.constant 37 : index
    %47 = vector.load %arg6[%c0_46, %c37] : memref<48x384xf32, #tpu.memory_space<vmem>>, vector<48x288xf32>
    %cst_47 = arith.constant dense<0.000000e+00> : vector<32x288xf32>
    %48 = tpu.matmul %46, %47, %cst_47 {dimension_numbers = #tpu.dot_dimension_numbers<[1], [0], [0], [1], [0, 0, 1, 1], [], []>} : vector<32x48xf32>, vector<48x288xf32>, vector<32x288xf32> -> vector<32x288xf32>
    %49 = arith.addf %44, %48 : vector<32x288xf32>
    %c8 = arith.constant 8 : index
    %c0_48 = arith.constant 0 : index
    %c0_49 = arith.constant 0 : index
    %50 = vector.load %arg3[%c8, %c0_48, %c0_49] : memref<9x32x48xf32, #tpu.memory_space<vmem>>, vector<1x32x48xf32>
    %51 = vector.shape_cast %50 : vector<1x32x48xf32> to vector<32x48xf32>
    %c0_50 = arith.constant 0 : index
    %c38 = arith.constant 38 : index
    %52 = vector.load %arg6[%c0_50, %c38] : memref<48x384xf32, #tpu.memory_space<vmem>>, vector<48x288xf32>
    %cst_51 = arith.constant dense<0.000000e+00> : vector<32x288xf32>
    %53 = tpu.matmul %51, %52, %cst_51 {dimension_numbers = #tpu.dot_dimension_numbers<[1], [0], [0], [1], [0, 0, 1, 1], [], []>} : vector<32x48xf32>, vector<48x288xf32>, vector<32x288xf32> -> vector<32x288xf32>
    %54 = arith.addf %49, %53 : vector<32x288xf32>
    %c0_52 = arith.constant 0 : index
    %c0_53 = arith.constant 0 : index
    %55 = vector.load %arg4[%c0_52, %c0_53] : memref<32x1xf32, #tpu.memory_space<vmem>>, vector<32x1xf32>
    %56 = vector.broadcast %55 : vector<32x1xf32> to vector<32x288xf32>
    %57 = arith.addf %54, %56 : vector<32x288xf32>
    %c0_54 = arith.constant 0 : index
    %c0_55 = arith.constant 0 : index
    %c0_56 = arith.constant 0 : index
    %58 = vector.load %arg5[%c0_54, %c0_55, %c0_56] : memref<1x32x288xf32, #tpu.memory_space<vmem>>, vector<1x32x288xf32>
    %59 = vector.shape_cast %58 : vector<1x32x288xf32> to vector<32x288xf32>
    %60 = vector.shape_cast %57 : vector<32x288xf32> to vector<1x32x288xf32>
    tpu.vector_store %arg5[%c0_54, %c0_55, %c0_56], %60 {strides = array<i32>} : memref<1x32x288xf32, #tpu.memory_space<vmem>>, vector<1x32x288xf32>,
    return
  }
  func.func @transform_0(%arg0: i32) -> (i32, i32, i32) {
    %c0_i32 = arith.constant 0 : i32
    %c0_i32_0 = arith.constant 0 : i32
    %c0_i32_1 = arith.constant 0 : i32
    return %arg0, %c0_i32, %c0_i32_0 : i32, i32, i32
  }
  func.func @transform_1(%arg0: i32) -> (i32, i32) {
    %c0_i32 = arith.constant 0 : i32
    %c0_i32_0 = arith.constant 0 : i32
    %c0_i32_1 = arith.constant 0 : i32
    return %c0_i32, %c0_i32_0 : i32, i32
  }
  func.func @transform_2(%arg0: i32) -> (i32, i32, i32) {
    %c0_i32 = arith.constant 0 : i32
    %c0_i32_0 = arith.constant 0 : i32
    %c0_i32_1 = arith.constant 0 : i32
    %c0_i32_2 = arith.constant 0 : i32
    return %c0_i32, %c0_i32_0, %c0_i32_1 : i32, i32, i32
  }
  func.func @transform_3(%arg0: i32) -> (i32, i32) {
    %c0_i32 = arith.constant 0 : i32
    %c0_i32_0 = arith.constant 0 : i32
    %c0_i32_1 = arith.constant 0 : i32
    return %c0_i32, %c0_i32_0 : i32, i32
  }
  func.func @transform_4(%arg0: i32) -> (i32, i32, i32) {
    %c0_i32 = arith.constant 0 : i32
    %c0_i32_0 = arith.constant 0 : i32
    %c0_i32_1 = arith.constant 0 : i32
    return %arg0, %c0_i32, %c0_i32_0 : i32, i32, i32
  }
}

</mosaic_0001>

<llo_original>
// kernel: tpu_custom_call.1
$region0: #{tpu_custom_call.1}
  #allocation0 [shape = 'u32[]', space=smem, size = 0x4, offset = 0x4, fixed_abs, tag = 'smem constant byte address 0x4 - core index']
  #allocation1 [shape = 'u32[144,128]{1,0:T(1,128)}', space=vmem, size = 0x12000, scoped, tag = 'internal scratch']
  #allocation2 [shape = 'f32[48,384]{1,0:T(8,128)}', space=vmem, size = 0x12000, scoped, tag = 'scratch operand']
  %s0 = inlined_call_operand.vmem [shape: f32[2,16,288], index: 0, kind: input, shape index: {}]
  %s1 = inlined_call_operand.vmem [shape: f32[48,16], index: 1, kind: input, shape index: {}]
  %s2 = inlined_call_operand.hbm [shape: f32[9,32,48], index: 2, kind: input, shape index: {}]
  %s3 = inlined_call_operand.vmem [shape: f32[32,1], index: 3, kind: input, shape index: {}]
  %s4 = inlined_call_operand.hbm [shape: f32[2,32,288], index: 4, kind: output, shape index: {}]
  %s5 = sld [smem:[#allocation0]]
  $region53: #{tpu_custom_call.1} parent=0
    _
  %s7 = ssub.s32 1, %s5
  %s8 = scalar_select 0, %s7, %s5
  $region1: #{tpu_custom_call.1} parent=0
    #allocation3 [shape = 'u8[147456]{0}', space=vmem, size = 0x24000, scoped, tag = 'input window, operand 2, single buffered']
    #allocation4 [shape = 's32[2]{0}', space=sflag, size = 0x8, scoped, tag = 'scoped memory for tpu_custom_call.1']
    #allocation5 [shape = 's32[2]{0}', space=sflag, size = 0x8, scoped, tag = 'scoped memory for tpu_custom_call.1']
    #allocation6 [shape = 'u8[98304]{0}', space=vmem, size = 0x18000, scoped, tag = 'output window, operand 0']
    %9 = vsyncpa [#allocation4], 0
    %10 = vsyncpa [#allocation5], 0
    %s11 = scalar_lea.sflag [#allocation5], 1
    %12 = vsyncpa %s11, 0
    loop: start=0, step=1, limit=4
    $region2: #{tpu_custom_call.1} parent=1 // loop_pre_header
      _
    $region3: #{tpu_custom_call.1} parent=1 // loop_header
      %s14 = sphi 0, %s18
      %p15 = scmp.ge.s32.totalorder %s14, 4
      %s24 = sphi 0, %s26
      %s27 = sphi 0, %s24
      %s28 = sphi 0, %s27
      %s44 = sphi 0, %s28
      %s48 = sphi 0, %s48
      %s50 = sphi 0, %s48
      %s51 = sphi 0, %s50
      %s65 = sphi 0, %s51
      %s69 = sphi 0, %s69
      %s71 = sphi 0, %s69
      %s72 = sphi 0, %s71
      %s86 = sphi 0, %s72
      %s90 = sphi 0, %s90
      %s92 = sphi 0, %s90
      %s93 = sphi 0, %s92
      %s107 = sphi 0, %s93
      %s113 = sphi 0, %s115
      %s116 = sphi 0, %s113
      %s117 = sphi 0, %s116
      %s133 = sphi 0, %s117
    $region4: #{tpu_custom_call.1} parent=1 // loop_header_branch
      %17 = sbr.rel (%p15) target = $region8
    $region5: #{tpu_custom_call.1} parent=1 // loop_body
      %s19 = ssub.s32 %s14, 1
      %s20 = ssub.s32 %s14, 2
      %s21 = sadd.s32 %s14, 1
      %s22 = ssub.s32 %s14, %s21
      %p23 = scmp.eq.s32.totalorder %s22, 0
      %s25 = sadd.s32 %s24, 1
      %s26 = scalar_select %p23, %s24, %s25
      %p29 = pneg %p23
      %p30 = scmp.eq.s32.totalorder %s14, 1
      %p31 = por %p29, %p30
      %p32 = scmp.ne.s32.totalorder %s24, %s27
      %p33 = scmp.eq.s32.totalorder %s14, 0
      %p34 = por %p32, %p33
      %p35 = scmp.ne.s32.totalorder %s24, %s27
      %p36 = scmp.eq.s32.totalorder %s19, 1
      %p37 = por %p35, %p36
      %p38 = scmp.ne.s32.totalorder %s27, %s28
      %p39 = scmp.eq.s32.totalorder %s19, 0
      %p40 = por %p38, %p39
      %p41 = scmp.ne.s32.totalorder %s27, %s28
      %p42 = scmp.eq.s32.totalorder %s20, 1
      %p43 = por %p41, %p42
      %p45 = scmp.ne.s32.totalorder %s28, %s44
      %p46 = scmp.eq.s32.totalorder %s20, 0
      %p47 = por %p45, %p46
      %s49 = sadd.s32 %s48, 1
      %p52 = scmp.eq.s32.totalorder %s14, 1
      %p53 = scmp.ne.s32.totalorder %s48, %s50
      %p54 = scmp.eq.s32.totalorder %s14, 0
      %p55 = por %p53, %p54
      %p56 = scmp.ne.s32.totalorder %s48, %s50
      %p57 = scmp.eq.s32.totalorder %s19, 1
      %p58 = por %p56, %p57
      %p59 = scmp.ne.s32.totalorder %s50, %s51
      %p60 = scmp.eq.s32.totalorder %s19, 0
      %p61 = por %p59, %p60
      %p62 = scmp.ne.s32.totalorder %s50, %s51
      %p63 = scmp.eq.s32.totalorder %s20, 1
      %p64 = por %p62, %p63
      %p66 = scmp.ne.s32.totalorder %s51, %s65
      %p67 = scmp.eq.s32.totalorder %s20, 0
      %p68 = por %p66, %p67
      %s70 = sadd.s32 %s69, 1
      %p73 = scmp.eq.s32.totalorder %s14, 1
      %p74 = scmp.ne.s32.totalorder %s69, %s71
      %p75 = scmp.eq.s32.totalorder %s14, 0
      %p76 = por %p74, %p75
      %p77 = scmp.ne.s32.totalorder %s69, %s71
      %p78 = scmp.eq.s32.totalorder %s19, 1
      %p79 = por %p77, %p78
      %p80 = scmp.ne.s32.totalorder %s71, %s72
      %p81 = scmp.eq.s32.totalorder %s19, 0
      %p82 = por %p80, %p81
      %p83 = scmp.ne.s32.totalorder %s71, %s72
      %p84 = scmp.eq.s32.totalorder %s20, 1
      %p85 = por %p83, %p84
      %p87 = scmp.ne.s32.totalorder %s72, %s86
      %p88 = scmp.eq.s32.totalorder %s20, 0
      %p89 = por %p87, %p88
      %s91 = sadd.s32 %s90, 1
      %p94 = scmp.eq.s32.totalorder %s14, 1
      %p95 = scmp.ne.s32.totalorder %s90, %s92
      %p96 = scmp.eq.s32.totalorder %s14, 0
      %p97 = por %p95, %p96
      %p98 = scmp.ne.s32.totalorder %s90, %s92
      %p99 = scmp.eq.s32.totalorder %s19, 1
      %p100 = por %p98, %p99
      %p101 = scmp.ne.s32.totalorder %s92, %s93
      %p102 = scmp.eq.s32.totalorder %s19, 0
      %p103 = por %p101, %p102
      %p104 = scmp.ne.s32.totalorder %s92, %s93
      %p105 = scmp.eq.s32.totalorder %s20, 1
      %p106 = por %p104, %p105
      %p108 = scmp.ne.s32.totalorder %s93, %s107
      %p109 = scmp.eq.s32.totalorder %s20, 0
      %p110 = por %p108, %p109
      %s111 = ssub.s32 %s14, %s21
      %p112 = scmp.eq.s32.totalorder %s111, 0
      %s114 = sadd.s32 %s113, 1
      %s115 = scalar_select %p112, %s113, %s114
      %p118 = pneg %p112
      %p119 = scmp.eq.s32.totalorder %s14, 1
      %p120 = por %p118, %p119
      %p121 = scmp.ne.s32.totalorder %s113, %s116
      %p122 = scmp.eq.s32.totalorder %s14, 0
      %p123 = por %p121, %p122
      %p124 = scmp.ne.s32.totalorder %s113, %s116
      %p125 = scmp.eq.s32.totalorder %s19, 1
      %p126 = por %p124, %p125
      %p127 = scmp.ne.s32.totalorder %s116, %s117
      %p128 = scmp.eq.s32.totalorder %s19, 0
      %p129 = por %p127, %p128
      %p130 = scmp.ne.s32.totalorder %s116, %s117
      %p131 = scmp.eq.s32.totalorder %s20, 1
      %p132 = por %p130, %p131
      %p134 = scmp.ne.s32.totalorder %s117, %s133
      %p135 = scmp.eq.s32.totalorder %s20, 0
      %p136 = por %p134, %p135
      %p137 = scmp.le.s32.totalorder 1, %s14
      %p138 = scmp.lt.s32.totalorder %s14, 3
      %p139 = pnand %p137, %p138
      %p140 = pneg %p139
      // Predicated region
      $region9: #{tpu_custom_call.1} parent=5 // pred_check
        _
      $region10: #{tpu_custom_call.1} parent=5 // pred_check_branch
        %142 = sbr.rel (%p139) target = $region12
      $region11: #{tpu_custom_call.1} parent=5 // pred_region
        %s143 = ssub.s32 %s14, 1
        // Predicated region
        $region13: #{tpu_custom_call.1} parent=11 // pred_check
          %p144 = pneg %p61
        $region14: #{tpu_custom_call.1} parent=11 // pred_check_branch
          %146 = sbr.rel (%p144) target = $region16
        $region15: #{tpu_custom_call.1} parent=11 // pred_region
          _
        $region16: #{tpu_custom_call.1} parent=11 // pred_fallthru
          _
        // Predicated region
        $region17: #{tpu_custom_call.1} parent=11 // pred_check
          %p147 = pneg %p82
        $region18: #{tpu_custom_call.1} parent=11 // pred_check_branch
          %149 = sbr.rel (%p147) target = $region20
        $region19: #{tpu_custom_call.1} parent=11 // pred_region
          %s151 = ssub.s32 4608, 4608
          %152 = vsyncadd [#allocation4], %s151
          %s153 = sshll.u32 [#allocation3], 4
          %s154 = int_to_ptr.vmem [resolvable:$true] %s153
          %159 = dma.hbm_to_vmem [thread:$0]  %s2, 4608, %s154, [#allocation4], 128, 128, 8
        $region20: #{tpu_custom_call.1} parent=11 // pred_fallthru
          _
        // Predicated region
        $region21: #{tpu_custom_call.1} parent=11 // pred_check
          %p160 = pneg %p103
        $region22: #{tpu_custom_call.1} parent=11 // pred_check_branch
          %162 = sbr.rel (%p160) target = $region24
        $region23: #{tpu_custom_call.1} parent=11 // pred_region
          _
        $region24: #{tpu_custom_call.1} parent=11 // pred_fallthru
          _
      $region12: #{tpu_custom_call.1} parent=5 // pred_fallthru
        _
      %p163 = scmp.lt.s32.totalorder %s14, 2
      // Predicated region
      $region25: #{tpu_custom_call.1} parent=5 // pred_check
        %p164 = pneg %p163
      $region26: #{tpu_custom_call.1} parent=5 // pred_check_branch
        %166 = sbr.rel (%p164) target = $region28
      $region27: #{tpu_custom_call.1} parent=5 // pred_region
        // Predicated region
        $region29: #{tpu_custom_call.1} parent=27 // pred_check
          %p167 = pneg %p34
        $region30: #{tpu_custom_call.1} parent=27 // pred_check_branch
          %169 = sbr.rel (%p167) target = $region32
        $region31: #{tpu_custom_call.1} parent=27 // pred_region
          %p170 = scmp.lt.s32.totalorder %s14, 1
          %s171 = scalar_select %p170, %s14, 1
          %s172 = smul.addr %s171, 6
          %s173 = smul.addr %s172, 8
          %s174 = scalar_lea.vmem %s0, %s173
        $region32: #{tpu_custom_call.1} parent=27 // pred_fallthru
          _
      $region28: #{tpu_custom_call.1} parent=5 // pred_fallthru
        _
      %p175 = scmp.le.s32.totalorder 1, %s14
      %p176 = scmp.lt.s32.totalorder %s14, 3
      %p177 = pnand %p175, %p176
      %p178 = pneg %p177
      // Predicated region
      $region33: #{tpu_custom_call.1} parent=5 // pred_check
        _
      $region34: #{tpu_custom_call.1} parent=5 // pred_check_branch
        %180 = sbr.rel (%p177) target = $region36
      $region35: #{tpu_custom_call.1} parent=5 // pred_region
        %s181 = ssub.s32 %s14, 1
        // Predicated region
        $region37: #{tpu_custom_call.1} parent=35 // pred_check
          %p182 = pneg %p82
        $region38: #{tpu_custom_call.1} parent=35 // pred_check_branch
          %184 = sbr.rel (%p182) target = $region40
        $region39: #{tpu_custom_call.1} parent=35 // pred_region
          %185 = dma.done [#allocation4], 4608
        $region40: #{tpu_custom_call.1} parent=35 // pred_fallthru
          _
        %p186 = scmp.lt.s32.totalorder %s19, 1
        %s187 = scalar_select %p186, %s19, 1
        %s188 = smul.addr %s187, 6
        %s189 = smul.addr %s188, 8
        %s190 = scalar_lea.vmem %s0, %s189
        %p191 = pneg %p40
        %p192 = pneg %p37
        %p193 = pneg %p61
        %p194 = pneg %p58
        %p195 = pneg %p82
        %p196 = pneg %p79
        %p197 = pneg %p103
        %p198 = pneg %p100
        %p199 = pneg %p129
        %p200 = pneg %p126
        %s201 = sand.u32 %s116, 1
        %s202 = scalar_lea.sflag [#allocation5], %s201
        %s203 = sand.u32 %s116, 1
        %s204 = smul.addr %s203, 96
        %s205 = scalar_lea.vmem [#allocation6], %s204
        %p206 = scmp.lt.s32.totalorder %s19, 1
        %s207 = scalar_select %p206, %s19, 1
        %s208 = smul.addr %s207, 6
        %s209 = smul.addr %s208, 8
        %s210 = scalar_lea.vmem %s0, %s209
        %v211 = vld [vmem:[%s1] sm:$0xff]
        %v212 = vld [vmem:[%s1 + $0x8] sm:$0xff]
        %v213 = vld [vmem:[%s1 + $0x10] sm:$0xff]
        %v214 = vld [vmem:[%s1 + $0x18] sm:$0xff]
        %v215 = vld [vmem:[%s1 + $0x20] sm:$0xff]
        %v216 = vld [vmem:[%s1 + $0x28] sm:$0xff]
        %v217 = vld [vmem:[%s210] sm:$0xff]
        %v218 = vld [vmem:[%s210 + $0x8] sm:$0xff]
        %v219 = vld [vmem:[%s210 + $0x10] sm:$0xff]
        %v220 = vld [vmem:[%s210 + $0x18] sm:$0xff]
        %v221 = vld [vmem:[%s210 + $0x20] sm:$0xff]
        %v222 = vld [vmem:[%s210 + $0x28] sm:$0xff]
        %vm223 = vcmask 130048
        %v225 = vsel %vm223, %v211, 0
        %v228 = vsel %vm223, %v212, 0
        %v231 = vsel %vm223, %v213, 0
        %v234 = vsel %vm223, %v214, 0
        %v237 = vsel %vm223, %v215, 0
        %v240 = vsel %vm223, %v216, 0
        %242 = vmatprep.subr.mxu0 0.0
        %243 = vmatpush1.msra.mxu0 0.0
        %244 = vmatprep.subr.mxu0 0.0
        %245 = vmatpush1.msra.mxu0 0.0
        %246 = vmatprep.subr.mxu0 0.0
        %247 = vmatpush1.msra.mxu0 0.0
        %248 = vmatprep.subr.mxu0 0.0
        %249 = vmatpush1.msra.mxu0 0.0
        %250 = vmatprep.subr.mxu0 0.0
        %251 = vmatpush1.msra.mxu0 0.0
        %252 = vmatprep.subr.mxu0 0.0
        %253 = vmatpush1.msra.mxu0 0.0
        %254 = vmatprep.subr.mxu0 0.0
        %255 = vmatpush1.msra.mxu0 0.0
        %256 = vmatprep.subr.mxu0 0.0
        %257 = vmatpush1.msra.mxu0 0.0
        %258 = vmatprep.subr.mxu0 0.0
        %259 = vmatpush1.msra.mxu0 0.0
        %260 = vmatprep.subr.mxu0 0.0
        %261 = vmatpush1.msra.mxu0 0.0
        %262 = vmatprep.subr.mxu0 0.0
        %263 = vmatpush1.msra.mxu0 0.0
        %264 = vmatprep.subr.mxu0 0.0
        %265 = vmatpush1.msra.mxu0 0.0
        %266 = vmatprep.subr.mxu0 0.0
        %267 = vmatpush1.msra.mxu0 0.0
        %268 = vmatprep.subr.mxu0 0.0
        %269 = vmatpush1.msra.mxu0 0.0
        %270 = vmatprep.subr.mxu0 %v221
        %271 = vmatpush1.msra.mxu0 %v220
        %272 = vmatprep.subr.mxu0 %v218
        %273 = vmatpush1.msra.mxu0 %v217
        %274 = vmatprep.subr.mxu0 0.0
        %275 = vmatpush2.msra.mxu0 0.0
        %276 = vmatprep.subr.mxu0 0.0
        %277 = vmatpush2.msra.mxu0 0.0
        %278 = vmatprep.subr.mxu0 0.0
        %279 = vmatpush2.msra.mxu0 0.0
        %280 = vmatprep.subr.mxu0 0.0
        %281 = vmatpush2.msra.mxu0 0.0
        %282 = vmatprep.subr.mxu0 0.0
        %283 = vmatpush2.msra.mxu0 0.0
        %284 = vmatprep.subr.mxu0 0.0
        %285 = vmatpush2.msra.mxu0 0.0
        %286 = vmatprep.subr.mxu0 0.0
        %287 = vmatpush2.msra.mxu0 0.0
        %288 = vmatprep.subr.mxu0 0.0
        %289 = vmatpush2.msra.mxu0 0.0
        %290 = vmatprep.subr.mxu0 0.0
        %291 = vmatpush2.msra.mxu0 0.0
        %292 = vmatprep.subr.mxu0 0.0
        %293 = vmatpush2.msra.mxu0 0.0
        %294 = vmatprep.subr.mxu0 0.0
        %295 = vmatpush2.msra.mxu0 0.0
        %296 = vmatprep.subr.mxu0 0.0
        %297 = vmatpush2.msra.mxu0 0.0
        %298 = vmatprep.subr.mxu0 0.0
        %299 = vmatpush2.msra.mxu0 0.0
        %300 = vmatprep.subr.mxu0 0.0
        %301 = vmatpush2.msra.mxu0 0.0
        %302 = vmatprep.subr.mxu0 0.0
        %303 = vmatpush2.msra.mxu0 0.0
        %304 = vmatprep.subr.mxu0 0.0
        %305 = vmatpush2.msra.mxu0 0.0
        %306 = vmatprep.mubr.f32.mxu0 0.0
        %307 = vmatmul.mubr.f32.gmra.mxu0 %v225
        %v308 = vpop.f32.mrf.mxu0
        %v309 = vadd.f32 0.0, %v308
        %v310 = vpop.f32.mrf.mxu0
        %v311 = vadd.f32 0.0, %v310
        %312 = vmatprep.mubr.f32.mxu0 0.0
        %313 = vmatmul.mubr.f32.gmra.mxu0 %v228
        %v314 = vpop.f32.mrf.mxu0
        %v315 = vadd.f32 0.0, %v314
        %v316 = vpop.f32.mrf.mxu0
        %v317 = vadd.f32 0.0, %v316
        %318 = vmatprep.mubr.f32.mxu0 0.0
        %319 = vmatmul.mubr.f32.gmra.mxu0 %v231
        %v320 = vpop.f32.mrf.mxu0
        %v321 = vadd.f32 0.0, %v320
        %v322 = vpop.f32.mrf.mxu0
        %v323 = vadd.f32 0.0, %v322
        %324 = vmatprep.mubr.f32.mxu0 0.0
        %325 = vmatmul.mubr.f32.gmra.mxu0 %v234
        %v326 = vpop.f32.mrf.mxu0
        %v327 = vadd.f32 0.0, %v326
        %v328 = vpop.f32.mrf.mxu0
        %v329 = vadd.f32 0.0, %v328
        %330 = vmatprep.mubr.f32.mxu0 0.0
        %331 = vmatmul.mubr.f32.gmra.mxu0 %v237
        %v332 = vpop.f32.mrf.mxu0
        %v333 = vadd.f32 0.0, %v332
        %v334 = vpop.f32.mrf.mxu0
        %v335 = vadd.f32 0.0, %v334
        %336 = vmatprep.mubr.f32.mxu0 0.0
        %337 = vmatmul.mubr.f32.gmra.mxu0 %v240
        %v338 = vpop.f32.mrf.mxu0
        %v339 = vadd.f32 0.0, %v338
        %v340 = vpop.f32.mrf.mxu0
        %v341 = vadd.f32 0.0, %v340
        %342 = vdwg.mxu0
        %343 = vmatprep.subr.mxu0 0.0
        %344 = vmatpush1.msra.mxu0 0.0
        %345 = vmatprep.subr.mxu0 0.0
        %346 = vmatpush1.msra.mxu0 0.0
        %347 = vmatprep.subr.mxu0 0.0
        %348 = vmatpush1.msra.mxu0 0.0
        %349 = vmatprep.subr.mxu0 0.0
        %350 = vmatpush1.msra.mxu0 0.0
        %351 = vmatprep.subr.mxu0 0.0
        %352 = vmatpush1.msra.mxu0 0.0
        %353 = vmatprep.subr.mxu0 0.0
        %354 = vmatpush1.msra.mxu0 0.0
        %355 = vmatprep.subr.mxu0 0.0
        %356 = vmatpush1.msra.mxu0 0.0
        %357 = vmatprep.subr.mxu0 0.0
        %358 = vmatpush1.msra.mxu0 0.0
        %359 = vmatprep.subr.mxu0 0.0
        %360 = vmatpush1.msra.mxu0 0.0
        %361 = vmatprep.subr.mxu0 0.0
        %362 = vmatpush1.msra.mxu0 0.0
        %363 = vmatprep.subr.mxu0 0.0
        %364 = vmatpush1.msra.mxu0 0.0
        %365 = vmatprep.subr.mxu0 0.0
        %366 = vmatpush1.msra.mxu0 0.0
        %367 = vmatprep.subr.mxu0 0.0
        %368 = vmatpush1.msra.mxu0 0.0
        %369 = vmatprep.subr.mxu0 0.0
        %370 = vmatpush1.msra.mxu0 0.0
        %371 = vmatprep.subr.mxu0 0.0
        %372 = vmatpush1.msra.mxu0 %v222
        %373 = vmatprep.subr.mxu0 0.0
        %374 = vmatpush1.msra.mxu0 %v219
        %375 = vmatprep.subr.mxu0 0.0
        %376 = vmatpush2.msra.mxu0 0.0
        %377 = vmatprep.subr.mxu0 0.0
        %378 = vmatpush2.msra.mxu0 0.0
        %379 = vmatprep.subr.mxu0 0.0
        %380 = vmatpush2.msra.mxu0 0.0
        %381 = vmatprep.subr.mxu0 0.0
        %382 = vmatpush2.msra.mxu0 0.0
        %383 = vmatprep.subr.mxu0 0.0
        %384 = vmatpush2.msra.mxu0 0.0
        %385 = vmatprep.subr.mxu0 0.0
        %386 = vmatpush2.msra.mxu0 0.0
        %387 = vmatprep.subr.mxu0 0.0
        %388 = vmatpush2.msra.mxu0 0.0
        %389 = vmatprep.subr.mxu0 0.0
        %390 = vmatpush2.msra.mxu0 0.0
        %391 = vmatprep.subr.mxu0 0.0
        %392 = vmatpush2.msra.mxu0 0.0
        %393 = vmatprep.subr.mxu0 0.0
        %394 = vmatpush2.msra.mxu0 0.0
        %395 = vmatprep.subr.mxu0 0.0
        %396 = vmatpush2.msra.mxu0 0.0
        %397 = vmatprep.subr.mxu0 0.0
        %398 = vmatpush2.msra.mxu0 0.0
        %399 = vmatprep.subr.mxu0 0.0
        %400 = vmatpush2.msra.mxu0 0.0
        %401 = vmatprep.subr.mxu0 0.0
        %402 = vmatpush2.msra.mxu0 0.0
        %403 = vmatprep.subr.mxu0 0.0
        %404 = vmatpush2.msra.mxu0 0.0
        %405 = vmatprep.subr.mxu0 0.0
        %406 = vmatpush2.msra.mxu0 0.0
        %407 = vmatprep.mubr.f32.mxu0 0.0
        %408 = vmatmul.mubr.f32.gmra.mxu0 %v225
        %v409 = vpop.f32.mrf.mxu0
        %v410 = vadd.f32 0.0, %v409
        %v411 = vpop.f32.mrf.mxu0
        %412 = vmatprep.mubr.f32.mxu0 0.0
        %413 = vmatmul.mubr.f32.gmra.mxu0 %v228
        %v414 = vpop.f32.mrf.mxu0
        %v415 = vadd.f32 0.0, %v414
        %v416 = vpop.f32.mrf.mxu0
        %417 = vmatprep.mubr.f32.mxu0 0.0
        %418 = vmatmul.mubr.f32.gmra.mxu0 %v231
        %v419 = vpop.f32.mrf.mxu0
        %v420 = vadd.f32 0.0, %v419
        %v421 = vpop.f32.mrf.mxu0
        %422 = vmatprep.mubr.f32.mxu0 0.0
        %423 = vmatmul.mubr.f32.gmra.mxu0 %v234
        %v424 = vpop.f32.mrf.mxu0
        %v425 = vadd.f32 0.0, %v424
        %v426 = vpop.f32.mrf.mxu0
        %427 = vmatprep.mubr.f32.mxu0 0.0
        %428 = vmatmul.mubr.f32.gmra.mxu0 %v237
        %v429 = vpop.f32.mrf.mxu0
        %v430 = vadd.f32 0.0, %v429
        %v431 = vpop.f32.mrf.mxu0
        %432 = vmatprep.mubr.f32.mxu0 0.0
        %433 = vmatmul.mubr.f32.gmra.mxu0 %v240
        %v434 = vpop.f32.mrf.mxu0
        %v435 = vadd.f32 0.0, %v434
        %v436 = vpop.f32.mrf.mxu0
        %437 = vdwg.mxu0
        %v438 = vmax.f32 %v309, 0.0
        %v439 = vmax.f32 %v311, 0.0
        %v440 = vmax.f32 %v410, 0.0
        %v441 = vmax.f32 %v315, 0.0
        %v442 = vmax.f32 %v317, 0.0
        %v443 = vmax.f32 %v415, 0.0
        %v444 = vmax.f32 %v321, 0.0
        %v445 = vmax.f32 %v323, 0.0
        %v446 = vmax.f32 %v420, 0.0
        %v447 = vmax.f32 %v327, 0.0
        %v448 = vmax.f32 %v329, 0.0
        %v449 = vmax.f32 %v425, 0.0
        %v450 = vmax.f32 %v333, 0.0
        %v451 = vmax.f32 %v335, 0.0
        %v452 = vmax.f32 %v430, 0.0
        %v453 = vmax.f32 %v339, 0.0
        %v454 = vmax.f32 %v341, 0.0
        %v455 = vmax.f32 %v435, 0.0
        %vm456 = vcmask 146432
        %457 = vst.msk [vmem:[#allocation2] sm:$0xff] %vm456, 0.0
        %458 = vst.msk [vmem:[#allocation2 + $0x18] sm:$0xff] %vm456, 0.0
        %459 = vst.msk [vmem:[#allocation2 + $0x30] sm:$0xff] %vm456, 0.0
        %460 = vst.msk [vmem:[#allocation2 + $0x48] sm:$0xff] %vm456, 0.0
        %461 = vst.msk [vmem:[#allocation2 + $0x60] sm:$0xff] %vm456, 0.0
        %462 = vst.msk [vmem:[#allocation2 + $0x78] sm:$0xff] %vm456, 0.0
        %vm463 = vcmask 1047952
        %464 = vst.msk [vmem:[#allocation2 + $0x10] sm:$0xff] %vm463, 0.0
        %465 = vst.msk [vmem:[#allocation2 + $0x28] sm:$0xff] %vm463, 0.0
        %466 = vst.msk [vmem:[#allocation2 + $0x40] sm:$0xff] %vm463, 0.0
        %467 = vst.msk [vmem:[#allocation2 + $0x58] sm:$0xff] %vm463, 0.0
        %468 = vst.msk [vmem:[#allocation2 + $0x70] sm:$0xff] %vm463, 0.0
        %469 = vst.msk [vmem:[#allocation2 + $0x88] sm:$0xff] %vm463, 0.0
        %488 = vrot.lane.b32.xlu0 %v438, 18
        %v489 = vpop.permute.xlu0 %488
        %490 = vrot.lane.b32.xlu0 %v439, 18
        %v491 = vpop.permute.xlu0 %490
        %492 = vrot.lane.b32.xlu0 %v440, 18
        %v493 = vpop.permute.xlu0 %492
        %494 = vrot.lane.b32.xlu0 %v441, 18
        %v495 = vpop.permute.xlu0 %494
        %496 = vrot.lane.b32.xlu0 %v442, 18
        %v497 = vpop.permute.xlu0 %496
        %498 = vrot.lane.b32.xlu0 %v443, 18
        %v499 = vpop.permute.xlu0 %498
        %500 = vrot.lane.b32.xlu0 %v444, 18
        %v501 = vpop.permute.xlu0 %500
        %502 = vrot.lane.b32.xlu0 %v445, 18
        %v503 = vpop.permute.xlu0 %502
        %504 = vrot.lane.b32.xlu0 %v446, 18
        %v505 = vpop.permute.xlu0 %504
        %506 = vrot.lane.b32.xlu0 %v447, 18
        %v507 = vpop.permute.xlu0 %506
        %508 = vrot.lane.b32.xlu0 %v448, 18
        %v509 = vpop.permute.xlu0 %508
        %510 = vrot.lane.b32.xlu0 %v449, 18
        %v511 = vpop.permute.xlu0 %510
        %512 = vrot.lane.b32.xlu0 %v450, 18
        %v513 = vpop.permute.xlu0 %512
        %514 = vrot.lane.b32.xlu0 %v451, 18
        %v515 = vpop.permute.xlu0 %514
        %516 = vrot.lane.b32.xlu0 %v452, 18
        %v517 = vpop.permute.xlu0 %516
        %518 = vrot.lane.b32.xlu0 %v453, 18
        %v519 = vpop.permute.xlu0 %518
        %520 = vrot.lane.b32.xlu0 %v454, 18
        %v521 = vpop.permute.xlu0 %520
        %522 = vrot.lane.b32.xlu0 %v455, 18
        %v523 = vpop.permute.xlu0 %522
        %v524 = vsel %vm456, %v489, %v491
        %v525 = vsel %vm456, %v491, %v493
        %v526 = vsel %vm456, %v495, %v497
        %v527 = vsel %vm456, %v497, %v499
        %v528 = vsel %vm456, %v501, %v503
        %v529 = vsel %vm456, %v503, %v505
        %v530 = vsel %vm456, %v507, %v509
        %v531 = vsel %vm456, %v509, %v511
        %v532 = vsel %vm456, %v513, %v515
        %v533 = vsel %vm456, %v515, %v517
        %v534 = vsel %vm456, %v519, %v521
        %v535 = vsel %vm456, %v521, %v523
        %vm554 = vcmask 1047696
        %555 = vst.msk [vmem:[#allocation2] sm:$0xff] %vm554, %v489
        %556 = vst [vmem:[#allocation2 + $0x8] sm:$0xff] %v524
        %vm557 = vcmask 408576
        %558 = vst.msk [vmem:[#allocation2 + $0x10] sm:$0xff] %vm557, %v525
        %559 = vst.msk [vmem:[#allocation2 + $0x18] sm:$0xff] %vm554, %v495
        %560 = vst [vmem:[#allocation2 + $0x20] sm:$0xff] %v526
        %561 = vst.msk [vmem:[#allocation2 + $0x28] sm:$0xff] %vm557, %v527
        %562 = vst.msk [vmem:[#allocation2 + $0x30] sm:$0xff] %vm554, %v501
        %563 = vst [vmem:[#allocation2 + $0x38] sm:$0xff] %v528
        %564 = vst.msk [vmem:[#allocation2 + $0x40] sm:$0xff] %vm557, %v529
        %565 = vst.msk [vmem:[#allocation2 + $0x48] sm:$0xff] %vm554, %v507
        %566 = vst [vmem:[#allocation2 + $0x50] sm:$0xff] %v530
        %567 = vst.msk [vmem:[#allocation2 + $0x58] sm:$0xff] %vm557, %v531
        %568 = vst.msk [vmem:[#allocation2 + $0x60] sm:$0xff] %vm554, %v513
        %569 = vst [vmem:[#allocation2 + $0x68] sm:$0xff] %v532
        %570 = vst.msk [vmem:[#allocation2 + $0x70] sm:$0xff] %vm557, %v533
        %571 = vst.msk [vmem:[#allocation2 + $0x78] sm:$0xff] %vm554, %v519
        %572 = vst [vmem:[#allocation2 + $0x80] sm:$0xff] %v534
        %573 = vst.msk [vmem:[#allocation2 + $0x88] sm:$0xff] %vm557, %v535
        %v574 = vld [vmem:[#allocation3] sm:$0xff]
        %v575 = vld [vmem:[#allocation3 + $0x8] sm:$0xff]
        %v576 = vld [vmem:[#allocation3 + $0x10] sm:$0xff]
        %v577 = vld [vmem:[#allocation3 + $0x18] sm:$0xff]
        %v578 = vld [vmem:[#allocation2] sm:$0xff]
        %v579 = vld [vmem:[#allocation2 + $0x8] sm:$0xff]
        %v580 = vld [vmem:[#allocation2 + $0x10] sm:$0xff]
        %v581 = vld [vmem:[#allocation2 + $0x18] sm:$0xff]
        %v582 = vld [vmem:[#allocation2 + $0x20] sm:$0xff]
        %v583 = vld [vmem:[#allocation2 + $0x28] sm:$0xff]
        %v584 = vld [vmem:[#allocation2 + $0x30] sm:$0xff]
        %v585 = vld [vmem:[#allocation2 + $0x38] sm:$0xff]
        %v586 = vld [vmem:[#allocation2 + $0x40] sm:$0xff]
        %v587 = vld [vmem:[#allocation2 + $0x48] sm:$0xff]
        %v588 = vld [vmem:[#allocation2 + $0x50] sm:$0xff]
        %v589 = vld [vmem:[#allocation2 + $0x58] sm:$0xff]
        %v590 = vld [vmem:[#allocation2 + $0x60] sm:$0xff]
        %v591 = vld [vmem:[#allocation2 + $0x68] sm:$0xff]
        %v592 = vld [vmem:[#allocation2 + $0x70] sm:$0xff]
        %v593 = vld [vmem:[#allocation2 + $0x78] sm:$0xff]
        %v594 = vld [vmem:[#allocation2 + $0x80] sm:$0xff]
        %v595 = vld [vmem:[#allocation2 + $0x88] sm:$0xff]
        %s596 = scalar_lea.vmem [#allocation3], 32
        %v597 = vld [vmem:[%s596] sm:$0xff]
        %v598 = vld [vmem:[%s596 + $0x8] sm:$0xff]
        %v599 = vld [vmem:[%s596 + $0x10] sm:$0xff]
        %v600 = vld [vmem:[%s596 + $0x18] sm:$0xff]
        %619 = vrot.lane.b32.xlu0 %v578, 127
        %v620 = vpop.permute.xlu0 %619
        %621 = vrot.lane.b32.xlu0 %v579, 127
        %v622 = vpop.permute.xlu0 %621
        %623 = vrot.lane.b32.xlu0 %v580, 127
        %v624 = vpop.permute.xlu0 %623
        %625 = vrot.lane.b32.xlu0 %v581, 127
        %v626 = vpop.permute.xlu0 %625
        %627 = vrot.lane.b32.xlu0 %v582, 127
        %v628 = vpop.permute.xlu0 %627
        %629 = vrot.lane.b32.xlu0 %v583, 127
        %v630 = vpop.permute.xlu0 %629
        %631 = vrot.lane.b32.xlu0 %v584, 127
        %v632 = vpop.permute.xlu0 %631
        %633 = vrot.lane.b32.xlu0 %v585, 127
        %v634 = vpop.permute.xlu0 %633
        %635 = vrot.lane.b32.xlu0 %v586, 127
        %v636 = vpop.permute.xlu0 %635
        %637 = vrot.lane.b32.xlu0 %v587, 127
        %v638 = vpop.permute.xlu0 %637
        %639 = vrot.lane.b32.xlu0 %v588, 127
        %v640 = vpop.permute.xlu0 %639
        %641 = vrot.lane.b32.xlu0 %v589, 127
        %v642 = vpop.permute.xlu0 %641
        %643 = vrot.lane.b32.xlu0 %v590, 127
        %v644 = vpop.permute.xlu0 %643
        %645 = vrot.lane.b32.xlu0 %v591, 127
        %v646 = vpop.permute.xlu0 %645
        %647 = vrot.lane.b32.xlu0 %v592, 127
        %v648 = vpop.permute.xlu0 %647
        %649 = vrot.lane.b32.xlu0 %v593, 127
        %v650 = vpop.permute.xlu0 %649
        %651 = vrot.lane.b32.xlu0 %v594, 127
        %v652 = vpop.permute.xlu0 %651
        %653 = vrot.lane.b32.xlu0 %v595, 127
        %v654 = vpop.permute.xlu0 %653
        %vm655 = vcmask 1039360
        %v656 = vsel %vm655, %v620, %v622
        %v657 = vsel %vm655, %v622, %v624
        %v658 = vsel %vm655, %v626, %v628
        %v659 = vsel %vm655, %v628, %v630
        %v660 = vsel %vm655, %v632, %v634
        %v661 = vsel %vm655, %v634, %v636
        %v662 = vsel %vm655, %v638, %v640
        %v663 = vsel %vm655, %v640, %v642
        %v664 = vsel %vm655, %v644, %v646
        %v665 = vsel %vm655, %v646, %v648
        %v666 = vsel %vm655, %v650, %v652
        %v667 = vsel %vm655, %v652, %v654
        %vm686 = vcmask 392192
        %v688 = vsel %vm686, %v597, 0
        %v691 = vsel %vm686, %v598, 0
        %v694 = vsel %vm686, %v599, 0
        %v697 = vsel %vm686, %v600, 0
        %699 = vmatprep.subr.mxu0 0.0
        %700 = vmatpush1.msra.mxu0 0.0
        %701 = vmatprep.subr.mxu0 0.0
        %702 = vmatpush1.msra.mxu0 0.0
        %703 = vmatprep.subr.mxu0 0.0
        %704 = vmatpush1.msra.mxu0 0.0
        %705 = vmatprep.subr.mxu0 0.0
        %706 = vmatpush1.msra.mxu0 0.0
        %707 = vmatprep.subr.mxu0 0.0
        %708 = vmatpush1.msra.mxu0 0.0
        %709 = vmatprep.subr.mxu0 0.0
        %710 = vmatpush1.msra.mxu0 0.0
        %711 = vmatprep.subr.mxu0 0.0
        %712 = vmatpush1.msra.mxu0 0.0
        %713 = vmatprep.subr.mxu0 0.0
        %714 = vmatpush1.msra.mxu0 0.0
        %715 = vmatprep.subr.mxu0 0.0
        %716 = vmatpush1.msra.mxu0 0.0
        %717 = vmatprep.subr.mxu0 0.0
        %718 = vmatpush1.msra.mxu0 0.0
        %719 = vmatprep.subr.mxu0 %v667
        %720 = vmatpush1.msra.mxu0 %v666
        %721 = vmatprep.subr.mxu0 %v665
        %722 = vmatpush1.msra.mxu0 %v664
        %723 = vmatprep.subr.mxu0 %v663
        %724 = vmatpush1.msra.mxu0 %v662
        %725 = vmatprep.subr.mxu0 %v661
        %726 = vmatpush1.msra.mxu0 %v660
        %727 = vmatprep.subr.mxu0 %v659
        %728 = vmatpush1.msra.mxu0 %v658
        %729 = vmatprep.subr.mxu0 %v657
        %730 = vmatpush1.msra.mxu0 %v656
        %731 = vmatprep.subr.mxu0 0.0
        %732 = vmatpush2.msra.mxu0 0.0
        %733 = vmatprep.subr.mxu0 0.0
        %734 = vmatpush2.msra.mxu0 0.0
        %735 = vmatprep.subr.mxu0 0.0
        %736 = vmatpush2.msra.mxu0 0.0
        %737 = vmatprep.subr.mxu0 0.0
        %738 = vmatpush2.msra.mxu0 0.0
        %739 = vmatprep.subr.mxu0 0.0
        %740 = vmatpush2.msra.mxu0 0.0
        %741 = vmatprep.subr.mxu0 0.0
        %742 = vmatpush2.msra.mxu0 0.0
        %743 = vmatprep.subr.mxu0 0.0
        %744 = vmatpush2.msra.mxu0 0.0
        %745 = vmatprep.subr.mxu0 0.0
        %746 = vmatpush2.msra.mxu0 0.0
        %747 = vmatprep.subr.mxu0 0.0
        %748 = vmatpush2.msra.mxu0 0.0
        %749 = vmatprep.subr.mxu0 0.0
        %750 = vmatpush2.msra.mxu0 0.0
        %751 = vmatprep.subr.mxu0 0.0
        %752 = vmatpush2.msra.mxu0 0.0
        %753 = vmatprep.subr.mxu0 0.0
        %754 = vmatpush2.msra.mxu0 0.0
        %755 = vmatprep.subr.mxu0 0.0
        %756 = vmatpush2.msra.mxu0 0.0
        %757 = vmatprep.subr.mxu0 0.0
        %758 = vmatpush2.msra.mxu0 0.0
        %759 = vmatprep.subr.mxu0 0.0
        %760 = vmatpush2.msra.mxu0 0.0
        %761 = vmatprep.subr.mxu0 0.0
        %762 = vmatpush2.msra.mxu0 0.0
        %763 = vmatprep.mubr.f32.mxu0 0.0
        %764 = vmatmul.mubr.f32.gmra.mxu0 %v688
        %v765 = vpop.f32.mrf.mxu0
        %v766 = vadd.f32 0.0, %v765
        %v767 = vpop.f32.mrf.mxu0
        %v768 = vadd.f32 0.0, %v767
        %769 = vmatprep.mubr.f32.mxu0 0.0
        %770 = vmatmul.mubr.f32.gmra.mxu0 %v691
        %v771 = vpop.f32.mrf.mxu0
        %v772 = vadd.f32 0.0, %v771
        %v773 = vpop.f32.mrf.mxu0
        %v774 = vadd.f32 0.0, %v773
        %775 = vmatprep.mubr.f32.mxu0 0.0
        %776 = vmatmul.mubr.f32.gmra.mxu0 %v694
        %v777 = vpop.f32.mrf.mxu0
        %v778 = vadd.f32 0.0, %v777
        %v779 = vpop.f32.mrf.mxu0
        %v780 = vadd.f32 0.0, %v779
        %781 = vmatprep.mubr.f32.mxu0 0.0
        %782 = vmatmul.mubr.f32.gmra.mxu0 %v697
        %v783 = vpop.f32.mrf.mxu0
        %v784 = vadd.f32 0.0, %v783
        %v785 = vpop.f32.mrf.mxu0
        %v786 = vadd.f32 0.0, %v785
        %787 = vdwg.mxu0
        %788 = vmatprep.subr.mxu0 0.0
        %789 = vmatpush1.msra.mxu0 0.0
        %790 = vmatprep.subr.mxu0 0.0
        %791 = vmatpush1.msra.mxu0 0.0
        %792 = vmatprep.subr.mxu0 0.0
        %793 = vmatpush1.msra.mxu0 0.0
        %794 = vmatprep.subr.mxu0 0.0
        %795 = vmatpush1.msra.mxu0 0.0
        %796 = vmatprep.subr.mxu0 0.0
        %797 = vmatpush1.msra.mxu0 0.0
        %798 = vmatprep.subr.mxu0 0.0
        %799 = vmatpush1.msra.mxu0 0.0
        %800 = vmatprep.subr.mxu0 0.0
        %801 = vmatpush1.msra.mxu0 0.0
        %802 = vmatprep.subr.mxu0 0.0
        %803 = vmatpush1.msra.mxu0 0.0
        %804 = vmatprep.subr.mxu0 0.0
        %805 = vmatpush1.msra.mxu0 0.0
        %806 = vmatprep.subr.mxu0 0.0
        %807 = vmatpush1.msra.mxu0 0.0
        %808 = vmatprep.subr.mxu0 0.0
        %809 = vmatpush1.msra.mxu0 %v654
        %810 = vmatprep.subr.mxu0 0.0
        %811 = vmatpush1.msra.mxu0 %v648
        %812 = vmatprep.subr.mxu0 0.0
        %813 = vmatpush1.msra.mxu0 %v642
        %814 = vmatprep.subr.mxu0 0.0
        %815 = vmatpush1.msra.mxu0 %v636
        %816 = vmatprep.subr.mxu0 0.0
        %817 = vmatpush1.msra.mxu0 %v630
        %818 = vmatprep.subr.mxu0 0.0
        %819 = vmatpush1.msra.mxu0 %v624
        %820 = vmatprep.subr.mxu0 0.0
        %821 = vmatpush2.msra.mxu0 0.0
        %822 = vmatprep.subr.mxu0 0.0
        %823 = vmatpush2.msra.mxu0 0.0
        %824 = vmatprep.subr.mxu0 0.0
        %825 = vmatpush2.msra.mxu0 0.0
        %826 = vmatprep.subr.mxu0 0.0
        %827 = vmatpush2.msra.mxu0 0.0
        %828 = vmatprep.subr.mxu0 0.0
        %829 = vmatpush2.msra.mxu0 0.0
        %830 = vmatprep.subr.mxu0 0.0
        %831 = vmatpush2.msra.mxu0 0.0
        %832 = vmatprep.subr.mxu0 0.0
        %833 = vmatpush2.msra.mxu0 0.0
        %834 = vmatprep.subr.mxu0 0.0
        %835 = vmatpush2.msra.mxu0 0.0
        %836 = vmatprep.subr.mxu0 0.0
        %837 = vmatpush2.msra.mxu0 0.0
        %838 = vmatprep.subr.mxu0 0.0
        %839 = vmatpush2.msra.mxu0 0.0
        %840 = vmatprep.subr.mxu0 0.0
        %841 = vmatpush2.msra.mxu0 0.0
        %842 = vmatprep.subr.mxu0 0.0
        %843 = vmatpush2.msra.mxu0 0.0
        %844 = vmatprep.subr.mxu0 0.0
        %845 = vmatpush2.msra.mxu0 0.0
        %846 = vmatprep.subr.mxu0 0.0
        %847 = vmatpush2.msra.mxu0 0.0
        %848 = vmatprep.subr.mxu0 0.0
        %849 = vmatpush2.msra.mxu0 0.0
        %850 = vmatprep.subr.mxu0 0.0
        %851 = vmatpush2.msra.mxu0 0.0
        %852 = vmatprep.mubr.f32.mxu0 0.0
        %853 = vmatmul.mubr.f32.gmra.mxu0 %v688
        %v854 = vpop.f32.mrf.mxu0
        %v855 = vadd.f32 0.0, %v854
        %v856 = vpop.f32.mrf.mxu0
        %857 = vmatprep.mubr.f32.mxu0 0.0
        %858 = vmatmul.mubr.f32.gmra.mxu0 %v691
        %v859 = vpop.f32.mrf.mxu0
        %v860 = vadd.f32 0.0, %v859
        %v861 = vpop.f32.mrf.mxu0
        %862 = vmatprep.mubr.f32.mxu0 0.0
        %863 = vmatmul.mubr.f32.gmra.mxu0 %v694
        %v864 = vpop.f32.mrf.mxu0
        %v865 = vadd.f32 0.0, %v864
        %v866 = vpop.f32.mrf.mxu0
        %867 = vmatprep.mubr.f32.mxu0 0.0
        %868 = vmatmul.mubr.f32.gmra.mxu0 %v697
        %v869 = vpop.f32.mrf.mxu0
        %v870 = vadd.f32 0.0, %v869
        %v871 = vpop.f32.mrf.mxu0
        %872 = vdwg.mxu0
        %v874 = vsel %vm686, %v574, 0
        %v877 = vsel %vm686, %v575, 0
        %v880 = vsel %vm686, %v576, 0
        %v883 = vsel %vm686, %v577, 0
        %885 = vmatprep.subr.mxu0 0.0
        %886 = vmatpush1.msra.mxu0 0.0
        %887 = vmatprep.subr.mxu0 0.0
        %888 = vmatpush1.msra.mxu0 0.0
        %889 = vmatprep.subr.mxu0 0.0
        %890 = vmatpush1.msra.mxu0 0.0
        %891 = vmatprep.subr.mxu0 0.0
        %892 = vmatpush1.msra.mxu0 0.0
        %893 = vmatprep.subr.mxu0 0.0
        %894 = vmatpush1.msra.mxu0 0.0
        %895 = vmatprep.subr.mxu0 0.0
        %896 = vmatpush1.msra.mxu0 0.0
        %897 = vmatprep.subr.mxu0 0.0
        %898 = vmatpush1.msra.mxu0 0.0
        %899 = vmatprep.subr.mxu0 0.0
        %900 = vmatpush1.msra.mxu0 0.0
        %901 = vmatprep.subr.mxu0 0.0
        %902 = vmatpush1.msra.mxu0 0.0
        %903 = vmatprep.subr.mxu0 0.0
        %904 = vmatpush1.msra.mxu0 0.0
        %905 = vmatprep.subr.mxu0 %v594
        %906 = vmatpush1.msra.mxu0 %v593
        %907 = vmatprep.subr.mxu0 %v591
        %908 = vmatpush1.msra.mxu0 %v590
        %909 = vmatprep.subr.mxu0 %v588
        %910 = vmatpush1.msra.mxu0 %v587
        %911 = vmatprep.subr.mxu0 %v585
        %912 = vmatpush1.msra.mxu0 %v584
        %913 = vmatprep.subr.mxu0 %v582
        %914 = vmatpush1.msra.mxu0 %v581
        %915 = vmatprep.subr.mxu0 %v579
        %916 = vmatpush1.msra.mxu0 %v578
        %917 = vmatprep.subr.mxu0 0.0
        %918 = vmatpush2.msra.mxu0 0.0
        %919 = vmatprep.subr.mxu0 0.0
        %920 = vmatpush2.msra.mxu0 0.0
        %921 = vmatprep.subr.mxu0 0.0
        %922 = vmatpush2.msra.mxu0 0.0
        %923 = vmatprep.subr.mxu0 0.0
        %924 = vmatpush2.msra.mxu0 0.0
        %925 = vmatprep.subr.mxu0 0.0
        %926 = vmatpush2.msra.mxu0 0.0
        %927 = vmatprep.subr.mxu0 0.0
        %928 = vmatpush2.msra.mxu0 0.0
        %929 = vmatprep.subr.mxu0 0.0
        %930 = vmatpush2.msra.mxu0 0.0
        %931 = vmatprep.subr.mxu0 0.0
        %932 = vmatpush2.msra.mxu0 0.0
        %933 = vmatprep.subr.mxu0 0.0
        %934 = vmatpush2.msra.mxu0 0.0
        %935 = vmatprep.subr.mxu0 0.0
        %936 = vmatpush2.msra.mxu0 0.0
        %937 = vmatprep.subr.mxu0 0.0
        %938 = vmatpush2.msra.mxu0 0.0
        %939 = vmatprep.subr.mxu0 0.0
        %940 = vmatpush2.msra.mxu0 0.0
        %941 = vmatprep.subr.mxu0 0.0
        %942 = vmatpush2.msra.mxu0 0.0
        %943 = vmatprep.subr.mxu0 0.0
        %944 = vmatpush2.msra.mxu0 0.0
        %945 = vmatprep.subr.mxu0 0.0
        %946 = vmatpush2.msra.mxu0 0.0
        %947 = vmatprep.subr.mxu0 0.0
        %948 = vmatpush2.msra.mxu0 0.0
        %949 = vmatprep.mubr.f32.mxu0 0.0
        %950 = vmatmul.mubr.f32.gmra.mxu0 %v874
        %v951 = vpop.f32.mrf.mxu0
        %v952 = vadd.f32 %v766, %v951
        %v953 = vpop.f32.mrf.mxu0
        %v954 = vadd.f32 %v768, %v953
        %955 = vmatprep.mubr.f32.mxu0 0.0
        %956 = vmatmul.mubr.f32.gmra.mxu0 %v877
        %v957 = vpop.f32.mrf.mxu0
        %v958 = vadd.f32 %v772, %v957
        %v959 = vpop.f32.mrf.mxu0
        %v960 = vadd.f32 %v774, %v959
        %961 = vmatprep.mubr.f32.mxu0 0.0
        %962 = vmatmul.mubr.f32.gmra.mxu0 %v880
        %v963 = vpop.f32.mrf.mxu0
        %v964 = vadd.f32 %v778, %v963
        %v965 = vpop.f32.mrf.mxu0
        %v966 = vadd.f32 %v780, %v965
        %967 = vmatprep.mubr.f32.mxu0 0.0
        %968 = vmatmul.mubr.f32.gmra.mxu0 %v883
        %v969 = vpop.f32.mrf.mxu0
        %v970 = vadd.f32 %v784, %v969
        %v971 = vpop.f32.mrf.mxu0
        %v972 = vadd.f32 %v786, %v971
        %973 = vdwg.mxu0
        %974 = vmatprep.subr.mxu0 0.0
        %975 = vmatpush1.msra.mxu0 0.0
        %976 = vmatprep.subr.mxu0 0.0
        %977 = vmatpush1.msra.mxu0 0.0
        %978 = vmatprep.subr.mxu0 0.0
        %979 = vmatpush1.msra.mxu0 0.0
        %980 = vmatprep.subr.mxu0 0.0
        %981 = vmatpush1.msra.mxu0 0.0
        %982 = vmatprep.subr.mxu0 0.0
        %983 = vmatpush1.msra.mxu0 0.0
        %984 = vmatprep.subr.mxu0 0.0
        %985 = vmatpush1.msra.mxu0 0.0
        %986 = vmatprep.subr.mxu0 0.0
        %987 = vmatpush1.msra.mxu0 0.0
        %988 = vmatprep.subr.mxu0 0.0
        %989 = vmatpush1.msra.mxu0 0.0
        %990 = vmatprep.subr.mxu0 0.0
        %991 = vmatpush1.msra.mxu0 0.0
        %992 = vmatprep.subr.mxu0 0.0
        %993 = vmatpush1.msra.mxu0 0.0
        %994 = vmatprep.subr.mxu0 0.0
        %995 = vmatpush1.msra.mxu0 %v595
        %996 = vmatprep.subr.mxu0 0.0
        %997 = vmatpush1.msra.mxu0 %v592
        %998 = vmatprep.subr.mxu0 0.0
        %999 = vmatpush1.msra.mxu0 %v589
        %1000 = vmatprep.subr.mxu0 0.0
        %1001 = vmatpush1.msra.mxu0 %v586
        %1002 = vmatprep.subr.mxu0 0.0
        %1003 = vmatpush1.msra.mxu0 %v583
        %1004 = vmatprep.subr.mxu0 0.0
        %1005 = vmatpush1.msra.mxu0 %v580
        %1006 = vmatprep.subr.mxu0 0.0
        %1007 = vmatpush2.msra.mxu0 0.0
        %1008 = vmatprep.subr.mxu0 0.0
        %1009 = vmatpush2.msra.mxu0 0.0
        %1010 = vmatprep.subr.mxu0 0.0
        %1011 = vmatpush2.msra.mxu0 0.0
        %1012 = vmatprep.subr.mxu0 0.0
        %1013 = vmatpush2.msra.mxu0 0.0
        %1014 = vmatprep.subr.mxu0 0.0
        %1015 = vmatpush2.msra.mxu0 0.0
        %1016 = vmatprep.subr.mxu0 0.0
        %1017 = vmatpush2.msra.mxu0 0.0
        %1018 = vmatprep.subr.mxu0 0.0
        %1019 = vmatpush2.msra.mxu0 0.0
        %1020 = vmatprep.subr.mxu0 0.0
        %1021 = vmatpush2.msra.mxu0 0.0
        %1022 = vmatprep.subr.mxu0 0.0
        %1023 = vmatpush2.msra.mxu0 0.0
        %1024 = vmatprep.subr.mxu0 0.0
        %1025 = vmatpush2.msra.mxu0 0.0
        %1026 = vmatprep.subr.mxu0 0.0
        %1027 = vmatpush2.msra.mxu0 0.0
        %1028 = vmatprep.subr.mxu0 0.0
        %1029 = vmatpush2.msra.mxu0 0.0
        %1030 = vmatprep.subr.mxu0 0.0
        %1031 = vmatpush2.msra.mxu0 0.0
        %1032 = vmatprep.subr.mxu0 0.0
        %1033 = vmatpush2.msra.mxu0 0.0
        %1034 = vmatprep.subr.mxu0 0.0
        %1035 = vmatpush2.msra.mxu0 0.0
        %1036 = vmatprep.subr.mxu0 0.0
        %1037 = vmatpush2.msra.mxu0 0.0
        %1038 = vmatprep.mubr.f32.mxu0 0.0
        %1039 = vmatmul.mubr.f32.gmra.mxu0 %v874
        %v1040 = vpop.f32.mrf.mxu0
        %v1041 = vadd.f32 %v855, %v1040
        %v1042 = vpop.f32.mrf.mxu0
        %1043 = vmatprep.mubr.f32.mxu0 0.0
        %1044 = vmatmul.mubr.f32.gmra.mxu0 %v877
        %v1045 = vpop.f32.mrf.mxu0
        %v1046 = vadd.f32 %v860, %v1045
        %v1047 = vpop.f32.mrf.mxu0
        %1048 = vmatprep.mubr.f32.mxu0 0.0
        %1049 = vmatmul.mubr.f32.gmra.mxu0 %v880
        %v1050 = vpop.f32.mrf.mxu0
        %v1051 = vadd.f32 %v865, %v1050
        %v1052 = vpop.f32.mrf.mxu0
        %1053 = vmatprep.mubr.f32.mxu0 0.0
        %1054 = vmatmul.mubr.f32.gmra.mxu0 %v883
        %v1055 = vpop.f32.mrf.mxu0
        %v1056 = vadd.f32 %v870, %v1055
        %v1057 = vpop.f32.mrf.mxu0
        %1058 = vdwg.mxu0
        %s1059 = scalar_lea.vmem [#allocation3], 64
        %v1060 = vld [vmem:[%s1059] sm:$0xff]
        %v1061 = vld [vmem:[%s1059 + $0x8] sm:$0xff]
        %v1062 = vld [vmem:[%s1059 + $0x10] sm:$0xff]
        %v1063 = vld [vmem:[%s1059 + $0x18] sm:$0xff]
        %1064 = vrot.lane.b32.xlu0 %v578, 126
        %v1065 = vpop.permute.xlu0 %1064
        %1066 = vrot.lane.b32.xlu0 %v579, 126
        %v1067 = vpop.permute.xlu0 %1066
        %1068 = vrot.lane.b32.xlu0 %v580, 126
        %v1069 = vpop.permute.xlu0 %1068
        %1070 = vrot.lane.b32.xlu0 %v581, 126
        %v1071 = vpop.permute.xlu0 %1070
        %1072 = vrot.lane.b32.xlu0 %v582, 126
        %v1073 = vpop.permute.xlu0 %1072
        %1074 = vrot.lane.b32.xlu0 %v583, 126
        %v1075 = vpop.permute.xlu0 %1074
        %1076 = vrot.lane.b32.xlu0 %v584, 126
        %v1077 = vpop.permute.xlu0 %1076
        %1078 = vrot.lane.b32.xlu0 %v585, 126
        %v1079 = vpop.permute.xlu0 %1078
        %1080 = vrot.lane.b32.xlu0 %v586, 126
        %v1081 = vpop.permute.xlu0 %1080
        %1082 = vrot.lane.b32.xlu0 %v587, 126
        %v1083 = vpop.permute.xlu0 %1082
        %1084 = vrot.lane.b32.xlu0 %v588, 126
        %v1085 = vpop.permute.xlu0 %1084
        %1086 = vrot.lane.b32.xlu0 %v589, 126
        %v1087 = vpop.permute.xlu0 %1086
        %1088 = vrot.lane.b32.xlu0 %v590, 126
        %v1089 = vpop.permute.xlu0 %1088
        %1090 = vrot.lane.b32.xlu0 %v591, 126
        %v1091 = vpop.permute.xlu0 %1090
        %1092 = vrot.lane.b32.xlu0 %v592, 126
        %v1093 = vpop.permute.xlu0 %1092
        %1094 = vrot.lane.b32.xlu0 %v593, 126
        %v1095 = vpop.permute.xlu0 %1094
        %1096 = vrot.lane.b32.xlu0 %v594, 126
        %v1097 = vpop.permute.xlu0 %1096
        %1098 = vrot.lane.b32.xlu0 %v595, 126
        %v1099 = vpop.permute.xlu0 %1098
        %vm1100 = vcmask 1031168
        %v1101 = vsel %vm1100, %v1065, %v1067
        %v1102 = vsel %vm1100, %v1067, %v1069
        %v1103 = vsel %vm1100, %v1071, %v1073
        %v1104 = vsel %vm1100, %v1073, %v1075
        %v1105 = vsel %vm1100, %v1077, %v1079
        %v1106 = vsel %vm1100, %v1079, %v1081
        %v1107 = vsel %vm1100, %v1083, %v1085
        %v1108 = vsel %vm1100, %v1085, %v1087
        %v1109 = vsel %vm1100, %v1089, %v1091
        %v1110 = vsel %vm1100, %v1091, %v1093
        %v1111 = vsel %vm1100, %v1095, %v1097
        %v1112 = vsel %vm1100, %v1097, %v1099
        %v1132 = vsel %vm686, %v1060, 0
        %v1135 = vsel %vm686, %v1061, 0
        %v1138 = vsel %vm686, %v1062, 0
        %v1141 = vsel %vm686, %v1063, 0
        %1143 = vmatprep.subr.mxu0 0.0
        %1144 = vmatpush1.msra.mxu0 0.0
        %1145 = vmatprep.subr.mxu0 0.0
        %1146 = vmatpush1.msra.mxu0 0.0
        %1147 = vmatprep.subr.mxu0 0.0
        %1148 = vmatpush1.msra.mxu0 0.0
        %1149 = vmatprep.subr.mxu0 0.0
        %1150 = vmatpush1.msra.mxu0 0.0
        %1151 = vmatprep.subr.mxu0 0.0
        %1152 = vmatpush1.msra.mxu0 0.0
        %1153 = vmatprep.subr.mxu0 0.0
        %1154 = vmatpush1.msra.mxu0 0.0
        %1155 = vmatprep.subr.mxu0 0.0
        %1156 = vmatpush1.msra.mxu0 0.0
        %1157 = vmatprep.subr.mxu0 0.0
        %1158 = vmatpush1.msra.mxu0 0.0
        %1159 = vmatprep.subr.mxu0 0.0
        %1160 = vmatpush1.msra.mxu0 0.0
        %1161 = vmatprep.subr.mxu0 0.0
        %1162 = vmatpush1.msra.mxu0 0.0
        %1163 = vmatprep.subr.mxu0 %v1112
        %1164 = vmatpush1.msra.mxu0 %v1111
        %1165 = vmatprep.subr.mxu0 %v1110
        %1166 = vmatpush1.msra.mxu0 %v1109
        %1167 = vmatprep.subr.mxu0 %v1108
        %1168 = vmatpush1.msra.mxu0 %v1107
        %1169 = vmatprep.subr.mxu0 %v1106
        %1170 = vmatpush1.msra.mxu0 %v1105
        %1171 = vmatprep.subr.mxu0 %v1104
        %1172 = vmatpush1.msra.mxu0 %v1103
        %1173 = vmatprep.subr.mxu0 %v1102
        %1174 = vmatpush1.msra.mxu0 %v1101
        %1175 = vmatprep.subr.mxu0 0.0
        %1176 = vmatpush2.msra.mxu0 0.0
        %1177 = vmatprep.subr.mxu0 0.0
        %1178 = vmatpush2.msra.mxu0 0.0
        %1179 = vmatprep.subr.mxu0 0.0
        %1180 = vmatpush2.msra.mxu0 0.0
        %1181 = vmatprep.subr.mxu0 0.0
        %1182 = vmatpush2.msra.mxu0 0.0
        %1183 = vmatprep.subr.mxu0 0.0
        %1184 = vmatpush2.msra.mxu0 0.0
        %1185 = vmatprep.subr.mxu0 0.0
        %1186 = vmatpush2.msra.mxu0 0.0
        %1187 = vmatprep.subr.mxu0 0.0
        %1188 = vmatpush2.msra.mxu0 0.0
        %1189 = vmatprep.subr.mxu0 0.0
        %1190 = vmatpush2.msra.mxu0 0.0
        %1191 = vmatprep.subr.mxu0 0.0
        %1192 = vmatpush2.msra.mxu0 0.0
        %1193 = vmatprep.subr.mxu0 0.0
        %1194 = vmatpush2.msra.mxu0 0.0
        %1195 = vmatprep.subr.mxu0 0.0
        %1196 = vmatpush2.msra.mxu0 0.0
        %1197 = vmatprep.subr.mxu0 0.0
        %1198 = vmatpush2.msra.mxu0 0.0
        %1199 = vmatprep.subr.mxu0 0.0
        %1200 = vmatpush2.msra.mxu0 0.0
        %1201 = vmatprep.subr.mxu0 0.0
        %1202 = vmatpush2.msra.mxu0 0.0
        %1203 = vmatprep.subr.mxu0 0.0
        %1204 = vmatpush2.msra.mxu0 0.0
        %1205 = vmatprep.subr.mxu0 0.0
        %1206 = vmatpush2.msra.mxu0 0.0
        %1207 = vmatprep.mubr.f32.mxu0 0.0
        %1208 = vmatmul.mubr.f32.gmra.mxu0 %v1132
        %v1209 = vpop.f32.mrf.mxu0
        %v1210 = vadd.f32 0.0, %v1209
        %v1211 = vpop.f32.mrf.mxu0
        %v1212 = vadd.f32 0.0, %v1211
        %1213 = vmatprep.mubr.f32.mxu0 0.0
        %1214 = vmatmul.mubr.f32.gmra.mxu0 %v1135
        %v1215 = vpop.f32.mrf.mxu0
        %v1216 = vadd.f32 0.0, %v1215
        %v1217 = vpop.f32.mrf.mxu0
        %v1218 = vadd.f32 0.0, %v1217
        %1219 = vmatprep.mubr.f32.mxu0 0.0
        %1220 = vmatmul.mubr.f32.gmra.mxu0 %v1138
        %v1221 = vpop.f32.mrf.mxu0
        %v1222 = vadd.f32 0.0, %v1221
        %v1223 = vpop.f32.mrf.mxu0
        %v1224 = vadd.f32 0.0, %v1223
        %1225 = vmatprep.mubr.f32.mxu0 0.0
        %1226 = vmatmul.mubr.f32.gmra.mxu0 %v1141
        %v1227 = vpop.f32.mrf.mxu0
        %v1228 = vadd.f32 0.0, %v1227
        %v1229 = vpop.f32.mrf.mxu0
        %v1230 = vadd.f32 0.0, %v1229
        %1231 = vdwg.mxu0
        %1232 = vmatprep.subr.mxu0 0.0
        %1233 = vmatpush1.msra.mxu0 0.0
        %1234 = vmatprep.subr.mxu0 0.0
        %1235 = vmatpush1.msra.mxu0 0.0
        %1236 = vmatprep.subr.mxu0 0.0
        %1237 = vmatpush1.msra.mxu0 0.0
        %1238 = vmatprep.subr.mxu0 0.0
        %1239 = vmatpush1.msra.mxu0 0.0
        %1240 = vmatprep.subr.mxu0 0.0
        %1241 = vmatpush1.msra.mxu0 0.0
        %1242 = vmatprep.subr.mxu0 0.0
        %1243 = vmatpush1.msra.mxu0 0.0
        %1244 = vmatprep.subr.mxu0 0.0
        %1245 = vmatpush1.msra.mxu0 0.0
        %1246 = vmatprep.subr.mxu0 0.0
        %1247 = vmatpush1.msra.mxu0 0.0
        %1248 = vmatprep.subr.mxu0 0.0
        %1249 = vmatpush1.msra.mxu0 0.0
        %1250 = vmatprep.subr.mxu0 0.0
        %1251 = vmatpush1.msra.mxu0 0.0
        %1252 = vmatprep.subr.mxu0 0.0
        %1253 = vmatpush1.msra.mxu0 %v1099
        %1254 = vmatprep.subr.mxu0 0.0
        %1255 = vmatpush1.msra.mxu0 %v1093
        %1256 = vmatprep.subr.mxu0 0.0
        %1257 = vmatpush1.msra.mxu0 %v1087
        %1258 = vmatprep.subr.mxu0 0.0
        %1259 = vmatpush1.msra.mxu0 %v1081
        %1260 = vmatprep.subr.mxu0 0.0
        %1261 = vmatpush1.msra.mxu0 %v1075
        %1262 = vmatprep.subr.mxu0 0.0
        %1263 = vmatpush1.msra.mxu0 %v1069
        %1264 = vmatprep.subr.mxu0 0.0
        %1265 = vmatpush2.msra.mxu0 0.0
        %1266 = vmatprep.subr.mxu0 0.0
        %1267 = vmatpush2.msra.mxu0 0.0
        %1268 = vmatprep.subr.mxu0 0.0
        %1269 = vmatpush2.msra.mxu0 0.0
        %1270 = vmatprep.subr.mxu0 0.0
        %1271 = vmatpush2.msra.mxu0 0.0
        %1272 = vmatprep.subr.mxu0 0.0
        %1273 = vmatpush2.msra.mxu0 0.0
        %1274 = vmatprep.subr.mxu0 0.0
        %1275 = vmatpush2.msra.mxu0 0.0
        %1276 = vmatprep.subr.mxu0 0.0
        %1277 = vmatpush2.msra.mxu0 0.0
        %1278 = vmatprep.subr.mxu0 0.0
        %1279 = vmatpush2.msra.mxu0 0.0
        %1280 = vmatprep.subr.mxu0 0.0
        %1281 = vmatpush2.msra.mxu0 0.0
        %1282 = vmatprep.subr.mxu0 0.0
        %1283 = vmatpush2.msra.mxu0 0.0
        %1284 = vmatprep.subr.mxu0 0.0
        %1285 = vmatpush2.msra.mxu0 0.0
        %1286 = vmatprep.subr.mxu0 0.0
        %1287 = vmatpush2.msra.mxu0 0.0
        %1288 = vmatprep.subr.mxu0 0.0
        %1289 = vmatpush2.msra.mxu0 0.0
        %1290 = vmatprep.subr.mxu0 0.0
        %1291 = vmatpush2.msra.mxu0 0.0
        %1292 = vmatprep.subr.mxu0 0.0
        %1293 = vmatpush2.msra.mxu0 0.0
        %1294 = vmatprep.subr.mxu0 0.0
        %1295 = vmatpush2.msra.mxu0 0.0
        %1296 = vmatprep.mubr.f32.mxu0 0.0
        %1297 = vmatmul.mubr.f32.gmra.mxu0 %v1132
        %v1298 = vpop.f32.mrf.mxu0
        %v1299 = vadd.f32 0.0, %v1298
        %v1300 = vpop.f32.mrf.mxu0
        %1301 = vmatprep.mubr.f32.mxu0 0.0
        %1302 = vmatmul.mubr.f32.gmra.mxu0 %v1135
        %v1303 = vpop.f32.mrf.mxu0
        %v1304 = vadd.f32 0.0, %v1303
        %v1305 = vpop.f32.mrf.mxu0
        %1306 = vmatprep.mubr.f32.mxu0 0.0
        %1307 = vmatmul.mubr.f32.gmra.mxu0 %v1138
        %v1308 = vpop.f32.mrf.mxu0
        %v1309 = vadd.f32 0.0, %v1308
        %v1310 = vpop.f32.mrf.mxu0
        %1311 = vmatprep.mubr.f32.mxu0 0.0
        %1312 = vmatmul.mubr.f32.gmra.mxu0 %v1141
        %v1313 = vpop.f32.mrf.mxu0
        %v1314 = vadd.f32 0.0, %v1313
        %v1315 = vpop.f32.mrf.mxu0
        %1316 = vdwg.mxu0
        %v1317 = vadd.f32 %v952, %v1210
        %v1318 = vadd.f32 %v954, %v1212
        %v1319 = vadd.f32 %v1041, %v1299
        %v1320 = vadd.f32 %v958, %v1216
        %v1321 = vadd.f32 %v960, %v1218
        %v1322 = vadd.f32 %v1046, %v1304
        %v1323 = vadd.f32 %v964, %v1222
        %v1324 = vadd.f32 %v966, %v1224
        %v1325 = vadd.f32 %v1051, %v1309
        %v1326 = vadd.f32 %v970, %v1228
        %v1327 = vadd.f32 %v972, %v1230
        %v1328 = vadd.f32 %v1056, %v1314
        %s1329 = scalar_lea.vmem [#allocation3], 96
        %v1330 = vld [vmem:[%s1329] sm:$0xff]
        %v1331 = vld [vmem:[%s1329 + $0x8] sm:$0xff]
        %v1332 = vld [vmem:[%s1329 + $0x10] sm:$0xff]
        %v1333 = vld [vmem:[%s1329 + $0x18] sm:$0xff]
        %1334 = vrot.lane.b32.xlu0 %v578, 110
        %v1335 = vpop.permute.xlu0 %1334
        %1336 = vrot.lane.b32.xlu0 %v579, 110
        %v1337 = vpop.permute.xlu0 %1336
        %1338 = vrot.lane.b32.xlu0 %v580, 110
        %v1339 = vpop.permute.xlu0 %1338
        %1340 = vrot.lane.b32.xlu0 %v581, 110
        %v1341 = vpop.permute.xlu0 %1340
        %1342 = vrot.lane.b32.xlu0 %v582, 110
        %v1343 = vpop.permute.xlu0 %1342
        %1344 = vrot.lane.b32.xlu0 %v583, 110
        %v1345 = vpop.permute.xlu0 %1344
        %1346 = vrot.lane.b32.xlu0 %v584, 110
        %v1347 = vpop.permute.xlu0 %1346
        %1348 = vrot.lane.b32.xlu0 %v585, 110
        %v1349 = vpop.permute.xlu0 %1348
        %1350 = vrot.lane.b32.xlu0 %v586, 110
        %v1351 = vpop.permute.xlu0 %1350
        %1352 = vrot.lane.b32.xlu0 %v587, 110
        %v1353 = vpop.permute.xlu0 %1352
        %1354 = vrot.lane.b32.xlu0 %v588, 110
        %v1355 = vpop.permute.xlu0 %1354
        %1356 = vrot.lane.b32.xlu0 %v589, 110
        %v1357 = vpop.permute.xlu0 %1356
        %1358 = vrot.lane.b32.xlu0 %v590, 110
        %v1359 = vpop.permute.xlu0 %1358
        %1360 = vrot.lane.b32.xlu0 %v591, 110
        %v1361 = vpop.permute.xlu0 %1360
        %1362 = vrot.lane.b32.xlu0 %v592, 110
        %v1363 = vpop.permute.xlu0 %1362
        %1364 = vrot.lane.b32.xlu0 %v593, 110
        %v1365 = vpop.permute.xlu0 %1364
        %1366 = vrot.lane.b32.xlu0 %v594, 110
        %v1367 = vpop.permute.xlu0 %1366
        %1368 = vrot.lane.b32.xlu0 %v595, 110
        %v1369 = vpop.permute.xlu0 %1368
        %vm1370 = vcmask 900096
        %v1371 = vsel %vm1370, %v1335, %v1337
        %v1372 = vsel %vm1370, %v1337, %v1339
        %v1373 = vsel %vm1370, %v1341, %v1343
        %v1374 = vsel %vm1370, %v1343, %v1345
        %v1375 = vsel %vm1370, %v1347, %v1349
        %v1376 = vsel %vm1370, %v1349, %v1351
        %v1377 = vsel %vm1370, %v1353, %v1355
        %v1378 = vsel %vm1370, %v1355, %v1357
        %v1379 = vsel %vm1370, %v1359, %v1361
        %v1380 = vsel %vm1370, %v1361, %v1363
        %v1381 = vsel %vm1370, %v1365, %v1367
        %v1382 = vsel %vm1370, %v1367, %v1369
        %v1402 = vsel %vm686, %v1330, 0
        %v1405 = vsel %vm686, %v1331, 0
        %v1408 = vsel %vm686, %v1332, 0
        %v1411 = vsel %vm686, %v1333, 0
        %1413 = vmatprep.subr.mxu0 0.0
        %1414 = vmatpush1.msra.mxu0 0.0
        %1415 = vmatprep.subr.mxu0 0.0
        %1416 = vmatpush1.msra.mxu0 0.0
        %1417 = vmatprep.subr.mxu0 0.0
        %1418 = vmatpush1.msra.mxu0 0.0
        %1419 = vmatprep.subr.mxu0 0.0
        %1420 = vmatpush1.msra.mxu0 0.0
        %1421 = vmatprep.subr.mxu0 0.0
        %1422 = vmatpush1.msra.mxu0 0.0
        %1423 = vmatprep.subr.mxu0 0.0
        %1424 = vmatpush1.msra.mxu0 0.0
        %1425 = vmatprep.subr.mxu0 0.0
        %1426 = vmatpush1.msra.mxu0 0.0
        %1427 = vmatprep.subr.mxu0 0.0
        %1428 = vmatpush1.msra.mxu0 0.0
        %1429 = vmatprep.subr.mxu0 0.0
        %1430 = vmatpush1.msra.mxu0 0.0
        %1431 = vmatprep.subr.mxu0 0.0
        %1432 = vmatpush1.msra.mxu0 0.0
        %1433 = vmatprep.subr.mxu0 %v1382
        %1434 = vmatpush1.msra.mxu0 %v1381
        %1435 = vmatprep.subr.mxu0 %v1380
        %1436 = vmatpush1.msra.mxu0 %v1379
        %1437 = vmatprep.subr.mxu0 %v1378
        %1438 = vmatpush1.msra.mxu0 %v1377
        %1439 = vmatprep.subr.mxu0 %v1376
        %1440 = vmatpush1.msra.mxu0 %v1375
        %1441 = vmatprep.subr.mxu0 %v1374
        %1442 = vmatpush1.msra.mxu0 %v1373
        %1443 = vmatprep.subr.mxu0 %v1372
        %1444 = vmatpush1.msra.mxu0 %v1371
        %1445 = vmatprep.subr.mxu0 0.0
        %1446 = vmatpush2.msra.mxu0 0.0
        %1447 = vmatprep.subr.mxu0 0.0
        %1448 = vmatpush2.msra.mxu0 0.0
        %1449 = vmatprep.subr.mxu0 0.0
        %1450 = vmatpush2.msra.mxu0 0.0
        %1451 = vmatprep.subr.mxu0 0.0
        %1452 = vmatpush2.msra.mxu0 0.0
        %1453 = vmatprep.subr.mxu0 0.0
        %1454 = vmatpush2.msra.mxu0 0.0
        %1455 = vmatprep.subr.mxu0 0.0
        %1456 = vmatpush2.msra.mxu0 0.0
        %1457 = vmatprep.subr.mxu0 0.0
        %1458 = vmatpush2.msra.mxu0 0.0
        %1459 = vmatprep.subr.mxu0 0.0
        %1460 = vmatpush2.msra.mxu0 0.0
        %1461 = vmatprep.subr.mxu0 0.0
        %1462 = vmatpush2.msra.mxu0 0.0
        %1463 = vmatprep.subr.mxu0 0.0
        %1464 = vmatpush2.msra.mxu0 0.0
        %1465 = vmatprep.subr.mxu0 0.0
        %1466 = vmatpush2.msra.mxu0 0.0
        %1467 = vmatprep.subr.mxu0 0.0
        %1468 = vmatpush2.msra.mxu0 0.0
        %1469 = vmatprep.subr.mxu0 0.0
        %1470 = vmatpush2.msra.mxu0 0.0
        %1471 = vmatprep.subr.mxu0 0.0
        %1472 = vmatpush2.msra.mxu0 0.0
        %1473 = vmatprep.subr.mxu0 0.0
        %1474 = vmatpush2.msra.mxu0 0.0
        %1475 = vmatprep.subr.mxu0 0.0
        %1476 = vmatpush2.msra.mxu0 0.0
        %1477 = vmatprep.mubr.f32.mxu0 0.0
        %1478 = vmatmul.mubr.f32.gmra.mxu0 %v1402
        %v1479 = vpop.f32.mrf.mxu0
        %v1480 = vadd.f32 0.0, %v1479
        %v1481 = vpop.f32.mrf.mxu0
        %v1482 = vadd.f32 0.0, %v1481
        %1483 = vmatprep.mubr.f32.mxu0 0.0
        %1484 = vmatmul.mubr.f32.gmra.mxu0 %v1405
        %v1485 = vpop.f32.mrf.mxu0
        %v1486 = vadd.f32 0.0, %v1485
        %v1487 = vpop.f32.mrf.mxu0
        %v1488 = vadd.f32 0.0, %v1487
        %1489 = vmatprep.mubr.f32.mxu0 0.0
        %1490 = vmatmul.mubr.f32.gmra.mxu0 %v1408
        %v1491 = vpop.f32.mrf.mxu0
        %v1492 = vadd.f32 0.0, %v1491
        %v1493 = vpop.f32.mrf.mxu0
        %v1494 = vadd.f32 0.0, %v1493
        %1495 = vmatprep.mubr.f32.mxu0 0.0
        %1496 = vmatmul.mubr.f32.gmra.mxu0 %v1411
        %v1497 = vpop.f32.mrf.mxu0
        %v1498 = vadd.f32 0.0, %v1497
        %v1499 = vpop.f32.mrf.mxu0
        %v1500 = vadd.f32 0.0, %v1499
        %1501 = vdwg.mxu0
        %1502 = vmatprep.subr.mxu0 0.0
        %1503 = vmatpush1.msra.mxu0 0.0
        %1504 = vmatprep.subr.mxu0 0.0
        %1505 = vmatpush1.msra.mxu0 0.0
        %1506 = vmatprep.subr.mxu0 0.0
        %1507 = vmatpush1.msra.mxu0 0.0
        %1508 = vmatprep.subr.mxu0 0.0
        %1509 = vmatpush1.msra.mxu0 0.0
        %1510 = vmatprep.subr.mxu0 0.0
        %1511 = vmatpush1.msra.mxu0 0.0
        %1512 = vmatprep.subr.mxu0 0.0
        %1513 = vmatpush1.msra.mxu0 0.0
        %1514 = vmatprep.subr.mxu0 0.0
        %1515 = vmatpush1.msra.mxu0 0.0
        %1516 = vmatprep.subr.mxu0 0.0
        %1517 = vmatpush1.msra.mxu0 0.0
        %1518 = vmatprep.subr.mxu0 0.0
        %1519 = vmatpush1.msra.mxu0 0.0
        %1520 = vmatprep.subr.mxu0 0.0
        %1521 = vmatpush1.msra.mxu0 0.0
        %1522 = vmatprep.subr.mxu0 0.0
        %1523 = vmatpush1.msra.mxu0 %v1369
        %1524 = vmatprep.subr.mxu0 0.0
        %1525 = vmatpush1.msra.mxu0 %v1363
        %1526 = vmatprep.subr.mxu0 0.0
        %1527 = vmatpush1.msra.mxu0 %v1357
        %1528 = vmatprep.subr.mxu0 0.0
        %1529 = vmatpush1.msra.mxu0 %v1351
        %1530 = vmatprep.subr.mxu0 0.0
        %1531 = vmatpush1.msra.mxu0 %v1345
        %1532 = vmatprep.subr.mxu0 0.0
        %1533 = vmatpush1.msra.mxu0 %v1339
        %1534 = vmatprep.subr.mxu0 0.0
        %1535 = vmatpush2.msra.mxu0 0.0
        %1536 = vmatprep.subr.mxu0 0.0
        %1537 = vmatpush2.msra.mxu0 0.0
        %1538 = vmatprep.subr.mxu0 0.0
        %1539 = vmatpush2.msra.mxu0 0.0
        %1540 = vmatprep.subr.mxu0 0.0
        %1541 = vmatpush2.msra.mxu0 0.0
        %1542 = vmatprep.subr.mxu0 0.0
        %1543 = vmatpush2.msra.mxu0 0.0
        %1544 = vmatprep.subr.mxu0 0.0
        %1545 = vmatpush2.msra.mxu0 0.0
        %1546 = vmatprep.subr.mxu0 0.0
        %1547 = vmatpush2.msra.mxu0 0.0
        %1548 = vmatprep.subr.mxu0 0.0
        %1549 = vmatpush2.msra.mxu0 0.0
        %1550 = vmatprep.subr.mxu0 0.0
        %1551 = vmatpush2.msra.mxu0 0.0
        %1552 = vmatprep.subr.mxu0 0.0
        %1553 = vmatpush2.msra.mxu0 0.0
        %1554 = vmatprep.subr.mxu0 0.0
        %1555 = vmatpush2.msra.mxu0 0.0
        %1556 = vmatprep.subr.mxu0 0.0
        %1557 = vmatpush2.msra.mxu0 0.0
        %1558 = vmatprep.subr.mxu0 0.0
        %1559 = vmatpush2.msra.mxu0 0.0
        %1560 = vmatprep.subr.mxu0 0.0
        %1561 = vmatpush2.msra.mxu0 0.0
        %1562 = vmatprep.subr.mxu0 0.0
        %1563 = vmatpush2.msra.mxu0 0.0
        %1564 = vmatprep.subr.mxu0 0.0
        %1565 = vmatpush2.msra.mxu0 0.0
        %1566 = vmatprep.mubr.f32.mxu0 0.0
        %1567 = vmatmul.mubr.f32.gmra.mxu0 %v1402
        %v1568 = vpop.f32.mrf.mxu0
        %v1569 = vadd.f32 0.0, %v1568
        %v1570 = vpop.f32.mrf.mxu0
        %1571 = vmatprep.mubr.f32.mxu0 0.0
        %1572 = vmatmul.mubr.f32.gmra.mxu0 %v1405
        %v1573 = vpop.f32.mrf.mxu0
        %v1574 = vadd.f32 0.0, %v1573
        %v1575 = vpop.f32.mrf.mxu0
        %1576 = vmatprep.mubr.f32.mxu0 0.0
        %1577 = vmatmul.mubr.f32.gmra.mxu0 %v1408
        %v1578 = vpop.f32.mrf.mxu0
        %v1579 = vadd.f32 0.0, %v1578
        %v1580 = vpop.f32.mrf.mxu0
        %1581 = vmatprep.mubr.f32.mxu0 0.0
        %1582 = vmatmul.mubr.f32.gmra.mxu0 %v1411
        %v1583 = vpop.f32.mrf.mxu0
        %v1584 = vadd.f32 0.0, %v1583
        %v1585 = vpop.f32.mrf.mxu0
        %1586 = vdwg.mxu0
        %v1587 = vadd.f32 %v1317, %v1480
        %v1588 = vadd.f32 %v1318, %v1482
        %v1589 = vadd.f32 %v1319, %v1569
        %v1590 = vadd.f32 %v1320, %v1486
        %v1591 = vadd.f32 %v1321, %v1488
        %v1592 = vadd.f32 %v1322, %v1574
        %v1593 = vadd.f32 %v1323, %v1492
        %v1594 = vadd.f32 %v1324, %v1494
        %v1595 = vadd.f32 %v1325, %v1579
        %v1596 = vadd.f32 %v1326, %v1498
        %v1597 = vadd.f32 %v1327, %v1500
        %v1598 = vadd.f32 %v1328, %v1584
        %s1599 = scalar_lea.vmem [#allocation3], 128
        %v1600 = vld [vmem:[%s1599] sm:$0xff]
        %v1601 = vld [vmem:[%s1599 + $0x8] sm:$0xff]
        %v1602 = vld [vmem:[%s1599 + $0x10] sm:$0xff]
        %v1603 = vld [vmem:[%s1599 + $0x18] sm:$0xff]
        %1604 = vrot.lane.b32.xlu0 %v578, 109
        %v1605 = vpop.permute.xlu0 %1604
        %1606 = vrot.lane.b32.xlu0 %v579, 109
        %v1607 = vpop.permute.xlu0 %1606
        %1608 = vrot.lane.b32.xlu0 %v580, 109
        %v1609 = vpop.permute.xlu0 %1608
        %1610 = vrot.lane.b32.xlu0 %v581, 109
        %v1611 = vpop.permute.xlu0 %1610
        %1612 = vrot.lane.b32.xlu0 %v582, 109
        %v1613 = vpop.permute.xlu0 %1612
        %1614 = vrot.lane.b32.xlu0 %v583, 109
        %v1615 = vpop.permute.xlu0 %1614
        %1616 = vrot.lane.b32.xlu0 %v584, 109
        %v1617 = vpop.permute.xlu0 %1616
        %1618 = vrot.lane.b32.xlu0 %v585, 109
        %v1619 = vpop.permute.xlu0 %1618
        %1620 = vrot.lane.b32.xlu0 %v586, 109
        %v1621 = vpop.permute.xlu0 %1620
        %1622 = vrot.lane.b32.xlu0 %v587, 109
        %v1623 = vpop.permute.xlu0 %1622
        %1624 = vrot.lane.b32.xlu0 %v588, 109
        %v1625 = vpop.permute.xlu0 %1624
        %1626 = vrot.lane.b32.xlu0 %v589, 109
        %v1627 = vpop.permute.xlu0 %1626
        %1628 = vrot.lane.b32.xlu0 %v590, 109
        %v1629 = vpop.permute.xlu0 %1628
        %1630 = vrot.lane.b32.xlu0 %v591, 109
        %v1631 = vpop.permute.xlu0 %1630
        %1632 = vrot.lane.b32.xlu0 %v592, 109
        %v1633 = vpop.permute.xlu0 %1632
        %1634 = vrot.lane.b32.xlu0 %v593, 109
        %v1635 = vpop.permute.xlu0 %1634
        %1636 = vrot.lane.b32.xlu0 %v594, 109
        %v1637 = vpop.permute.xlu0 %1636
        %1638 = vrot.lane.b32.xlu0 %v595, 109
        %v1639 = vpop.permute.xlu0 %1638
        %vm1640 = vcmask 891904
        %v1641 = vsel %vm1640, %v1605, %v1607
        %v1642 = vsel %vm1640, %v1607, %v1609
        %v1643 = vsel %vm1640, %v1611, %v1613
        %v1644 = vsel %vm1640, %v1613, %v1615
        %v1645 = vsel %vm1640, %v1617, %v1619
        %v1646 = vsel %vm1640, %v1619, %v1621
        %v1647 = vsel %vm1640, %v1623, %v1625
        %v1648 = vsel %vm1640, %v1625, %v1627
        %v1649 = vsel %vm1640, %v1629, %v1631
        %v1650 = vsel %vm1640, %v1631, %v1633
        %v1651 = vsel %vm1640, %v1635, %v1637
        %v1652 = vsel %vm1640, %v1637, %v1639
        %v1672 = vsel %vm686, %v1600, 0
        %v1675 = vsel %vm686, %v1601, 0
        %v1678 = vsel %vm686, %v1602, 0
        %v1681 = vsel %vm686, %v1603, 0
        %1683 = vmatprep.subr.mxu0 0.0
        %1684 = vmatpush1.msra.mxu0 0.0
        %1685 = vmatprep.subr.mxu0 0.0
        %1686 = vmatpush1.msra.mxu0 0.0
        %1687 = vmatprep.subr.mxu0 0.0
        %1688 = vmatpush1.msra.mxu0 0.0
        %1689 = vmatprep.subr.mxu0 0.0
        %1690 = vmatpush1.msra.mxu0 0.0
        %1691 = vmatprep.subr.mxu0 0.0
        %1692 = vmatpush1.msra.mxu0 0.0
        %1693 = vmatprep.subr.mxu0 0.0
        %1694 = vmatpush1.msra.mxu0 0.0
        %1695 = vmatprep.subr.mxu0 0.0
        %1696 = vmatpush1.msra.mxu0 0.0
        %1697 = vmatprep.subr.mxu0 0.0
        %1698 = vmatpush1.msra.mxu0 0.0
        %1699 = vmatprep.subr.mxu0 0.0
        %1700 = vmatpush1.msra.mxu0 0.0
        %1701 = vmatprep.subr.mxu0 0.0
        %1702 = vmatpush1.msra.mxu0 0.0
        %1703 = vmatprep.subr.mxu0 %v1652
        %1704 = vmatpush1.msra.mxu0 %v1651
        %1705 = vmatprep.subr.mxu0 %v1650
        %1706 = vmatpush1.msra.mxu0 %v1649
        %1707 = vmatprep.subr.mxu0 %v1648
        %1708 = vmatpush1.msra.mxu0 %v1647
        %1709 = vmatprep.subr.mxu0 %v1646
        %1710 = vmatpush1.msra.mxu0 %v1645
        %1711 = vmatprep.subr.mxu0 %v1644
        %1712 = vmatpush1.msra.mxu0 %v1643
        %1713 = vmatprep.subr.mxu0 %v1642
        %1714 = vmatpush1.msra.mxu0 %v1641
        %1715 = vmatprep.subr.mxu0 0.0
        %1716 = vmatpush2.msra.mxu0 0.0
        %1717 = vmatprep.subr.mxu0 0.0
        %1718 = vmatpush2.msra.mxu0 0.0
        %1719 = vmatprep.subr.mxu0 0.0
        %1720 = vmatpush2.msra.mxu0 0.0
        %1721 = vmatprep.subr.mxu0 0.0
        %1722 = vmatpush2.msra.mxu0 0.0
        %1723 = vmatprep.subr.mxu0 0.0
        %1724 = vmatpush2.msra.mxu0 0.0
        %1725 = vmatprep.subr.mxu0 0.0
        %1726 = vmatpush2.msra.mxu0 0.0
        %1727 = vmatprep.subr.mxu0 0.0
        %1728 = vmatpush2.msra.mxu0 0.0
        %1729 = vmatprep.subr.mxu0 0.0
        %1730 = vmatpush2.msra.mxu0 0.0
        %1731 = vmatprep.subr.mxu0 0.0
        %1732 = vmatpush2.msra.mxu0 0.0
        %1733 = vmatprep.subr.mxu0 0.0
        %1734 = vmatpush2.msra.mxu0 0.0
        %1735 = vmatprep.subr.mxu0 0.0
        %1736 = vmatpush2.msra.mxu0 0.0
        %1737 = vmatprep.subr.mxu0 0.0
        %1738 = vmatpush2.msra.mxu0 0.0
        %1739 = vmatprep.subr.mxu0 0.0
        %1740 = vmatpush2.msra.mxu0 0.0
        %1741 = vmatprep.subr.mxu0 0.0
        %1742 = vmatpush2.msra.mxu0 0.0
        %1743 = vmatprep.subr.mxu0 0.0
        %1744 = vmatpush2.msra.mxu0 0.0
        %1745 = vmatprep.subr.mxu0 0.0
        %1746 = vmatpush2.msra.mxu0 0.0
        %1747 = vmatprep.mubr.f32.mxu0 0.0
        %1748 = vmatmul.mubr.f32.gmra.mxu0 %v1672
        %v1749 = vpop.f32.mrf.mxu0
        %v1750 = vadd.f32 0.0, %v1749
        %v1751 = vpop.f32.mrf.mxu0
        %v1752 = vadd.f32 0.0, %v1751
        %1753 = vmatprep.mubr.f32.mxu0 0.0
        %1754 = vmatmul.mubr.f32.gmra.mxu0 %v1675
        %v1755 = vpop.f32.mrf.mxu0
        %v1756 = vadd.f32 0.0, %v1755
        %v1757 = vpop.f32.mrf.mxu0
        %v1758 = vadd.f32 0.0, %v1757
        %1759 = vmatprep.mubr.f32.mxu0 0.0
        %1760 = vmatmul.mubr.f32.gmra.mxu0 %v1678
        %v1761 = vpop.f32.mrf.mxu0
        %v1762 = vadd.f32 0.0, %v1761
        %v1763 = vpop.f32.mrf.mxu0
        %v1764 = vadd.f32 0.0, %v1763
        %1765 = vmatprep.mubr.f32.mxu0 0.0
        %1766 = vmatmul.mubr.f32.gmra.mxu0 %v1681
        %v1767 = vpop.f32.mrf.mxu0
        %v1768 = vadd.f32 0.0, %v1767
        %v1769 = vpop.f32.mrf.mxu0
        %v1770 = vadd.f32 0.0, %v1769
        %1771 = vdwg.mxu0
        %1772 = vmatprep.subr.mxu0 0.0
        %1773 = vmatpush1.msra.mxu0 0.0
        %1774 = vmatprep.subr.mxu0 0.0
        %1775 = vmatpush1.msra.mxu0 0.0
        %1776 = vmatprep.subr.mxu0 0.0
        %1777 = vmatpush1.msra.mxu0 0.0
        %1778 = vmatprep.subr.mxu0 0.0
        %1779 = vmatpush1.msra.mxu0 0.0
        %1780 = vmatprep.subr.mxu0 0.0
        %1781 = vmatpush1.msra.mxu0 0.0
        %1782 = vmatprep.subr.mxu0 0.0
        %1783 = vmatpush1.msra.mxu0 0.0
        %1784 = vmatprep.subr.mxu0 0.0
        %1785 = vmatpush1.msra.mxu0 0.0
        %1786 = vmatprep.subr.mxu0 0.0
        %1787 = vmatpush1.msra.mxu0 0.0
        %1788 = vmatprep.subr.mxu0 0.0
        %1789 = vmatpush1.msra.mxu0 0.0
        %1790 = vmatprep.subr.mxu0 0.0
        %1791 = vmatpush1.msra.mxu0 0.0
        %1792 = vmatprep.subr.mxu0 0.0
        %1793 = vmatpush1.msra.mxu0 %v1639
        %1794 = vmatprep.subr.mxu0 0.0
        %1795 = vmatpush1.msra.mxu0 %v1633
        %1796 = vmatprep.subr.mxu0 0.0
        %1797 = vmatpush1.msra.mxu0 %v1627
        %1798 = vmatprep.subr.mxu0 0.0
        %1799 = vmatpush1.msra.mxu0 %v1621
        %1800 = vmatprep.subr.mxu0 0.0
        %1801 = vmatpush1.msra.mxu0 %v1615
        %1802 = vmatprep.subr.mxu0 0.0
        %1803 = vmatpush1.msra.mxu0 %v1609
        %1804 = vmatprep.subr.mxu0 0.0
        %1805 = vmatpush2.msra.mxu0 0.0
        %1806 = vmatprep.subr.mxu0 0.0
        %1807 = vmatpush2.msra.mxu0 0.0
        %1808 = vmatprep.subr.mxu0 0.0
        %1809 = vmatpush2.msra.mxu0 0.0
        %1810 = vmatprep.subr.mxu0 0.0
        %1811 = vmatpush2.msra.mxu0 0.0
        %1812 = vmatprep.subr.mxu0 0.0
        %1813 = vmatpush2.msra.mxu0 0.0
        %1814 = vmatprep.subr.mxu0 0.0
        %1815 = vmatpush2.msra.mxu0 0.0
        %1816 = vmatprep.subr.mxu0 0.0
        %1817 = vmatpush2.msra.mxu0 0.0
        %1818 = vmatprep.subr.mxu0 0.0
        %1819 = vmatpush2.msra.mxu0 0.0
        %1820 = vmatprep.subr.mxu0 0.0
        %1821 = vmatpush2.msra.mxu0 0.0
        %1822 = vmatprep.subr.mxu0 0.0
        %1823 = vmatpush2.msra.mxu0 0.0
        %1824 = vmatprep.subr.mxu0 0.0
        %1825 = vmatpush2.msra.mxu0 0.0
        %1826 = vmatprep.subr.mxu0 0.0
        %1827 = vmatpush2.msra.mxu0 0.0
        %1828 = vmatprep.subr.mxu0 0.0
        %1829 = vmatpush2.msra.mxu0 0.0
        %1830 = vmatprep.subr.mxu0 0.0
        %1831 = vmatpush2.msra.mxu0 0.0
        %1832 = vmatprep.subr.mxu0 0.0
        %1833 = vmatpush2.msra.mxu0 0.0
        %1834 = vmatprep.subr.mxu0 0.0
        %1835 = vmatpush2.msra.mxu0 0.0
        %1836 = vmatprep.mubr.f32.mxu0 0.0
        %1837 = vmatmul.mubr.f32.gmra.mxu0 %v1672
        %v1838 = vpop.f32.mrf.mxu0
        %v1839 = vadd.f32 0.0, %v1838
        %v1840 = vpop.f32.mrf.mxu0
        %1841 = vmatprep.mubr.f32.mxu0 0.0
        %1842 = vmatmul.mubr.f32.gmra.mxu0 %v1675
        %v1843 = vpop.f32.mrf.mxu0
        %v1844 = vadd.f32 0.0, %v1843
        %v1845 = vpop.f32.mrf.mxu0
        %1846 = vmatprep.mubr.f32.mxu0 0.0
        %1847 = vmatmul.mubr.f32.gmra.mxu0 %v1678
        %v1848 = vpop.f32.mrf.mxu0
        %v1849 = vadd.f32 0.0, %v1848
        %v1850 = vpop.f32.mrf.mxu0
        %1851 = vmatprep.mubr.f32.mxu0 0.0
        %1852 = vmatmul.mubr.f32.gmra.mxu0 %v1681
        %v1853 = vpop.f32.mrf.mxu0
        %v1854 = vadd.f32 0.0, %v1853
        %v1855 = vpop.f32.mrf.mxu0
        %1856 = vdwg.mxu0
        %v1857 = vadd.f32 %v1587, %v1750
        %v1858 = vadd.f32 %v1588, %v1752
        %v1859 = vadd.f32 %v1589, %v1839
        %v1860 = vadd.f32 %v1590, %v1756
        %v1861 = vadd.f32 %v1591, %v1758
        %v1862 = vadd.f32 %v1592, %v1844
        %v1863 = vadd.f32 %v1593, %v1762
        %v1864 = vadd.f32 %v1594, %v1764
        %v1865 = vadd.f32 %v1595, %v1849
        %v1866 = vadd.f32 %v1596, %v1768
        %v1867 = vadd.f32 %v1597, %v1770
        %v1868 = vadd.f32 %v1598, %v1854
        %s1869 = scalar_lea.vmem [#allocation3], 160
        %v1870 = vld [vmem:[%s1869] sm:$0xff]
        %v1871 = vld [vmem:[%s1869 + $0x8] sm:$0xff]
        %v1872 = vld [vmem:[%s1869 + $0x10] sm:$0xff]
        %v1873 = vld [vmem:[%s1869 + $0x18] sm:$0xff]
        %1874 = vrot.lane.b32.xlu0 %v578, 108
        %v1875 = vpop.permute.xlu0 %1874
        %1876 = vrot.lane.b32.xlu0 %v579, 108
        %v1877 = vpop.permute.xlu0 %1876
        %1878 = vrot.lane.b32.xlu0 %v580, 108
        %v1879 = vpop.permute.xlu0 %1878
        %1880 = vrot.lane.b32.xlu0 %v581, 108
        %v1881 = vpop.permute.xlu0 %1880
        %1882 = vrot.lane.b32.xlu0 %v582, 108
        %v1883 = vpop.permute.xlu0 %1882
        %1884 = vrot.lane.b32.xlu0 %v583, 108
        %v1885 = vpop.permute.xlu0 %1884
        %1886 = vrot.lane.b32.xlu0 %v584, 108
        %v1887 = vpop.permute.xlu0 %1886
        %1888 = vrot.lane.b32.xlu0 %v585, 108
        %v1889 = vpop.permute.xlu0 %1888
        %1890 = vrot.lane.b32.xlu0 %v586, 108
        %v1891 = vpop.permute.xlu0 %1890
        %1892 = vrot.lane.b32.xlu0 %v587, 108
        %v1893 = vpop.permute.xlu0 %1892
        %1894 = vrot.lane.b32.xlu0 %v588, 108
        %v1895 = vpop.permute.xlu0 %1894
        %1896 = vrot.lane.b32.xlu0 %v589, 108
        %v1897 = vpop.permute.xlu0 %1896
        %1898 = vrot.lane.b32.xlu0 %v590, 108
        %v1899 = vpop.permute.xlu0 %1898
        %1900 = vrot.lane.b32.xlu0 %v591, 108
        %v1901 = vpop.permute.xlu0 %1900
        %1902 = vrot.lane.b32.xlu0 %v592, 108
        %v1903 = vpop.permute.xlu0 %1902
        %1904 = vrot.lane.b32.xlu0 %v593, 108
        %v1905 = vpop.permute.xlu0 %1904
        %1906 = vrot.lane.b32.xlu0 %v594, 108
        %v1907 = vpop.permute.xlu0 %1906
        %1908 = vrot.lane.b32.xlu0 %v595, 108
        %v1909 = vpop.permute.xlu0 %1908
        %vm1910 = vcmask 883712
        %v1911 = vsel %vm1910, %v1875, %v1877
        %v1912 = vsel %vm1910, %v1877, %v1879
        %v1913 = vsel %vm1910, %v1881, %v1883
        %v1914 = vsel %vm1910, %v1883, %v1885
        %v1915 = vsel %vm1910, %v1887, %v1889
        %v1916 = vsel %vm1910, %v1889, %v1891
        %v1917 = vsel %vm1910, %v1893, %v1895
        %v1918 = vsel %vm1910, %v1895, %v1897
        %v1919 = vsel %vm1910, %v1899, %v1901
        %v1920 = vsel %vm1910, %v1901, %v1903
        %v1921 = vsel %vm1910, %v1905, %v1907
        %v1922 = vsel %vm1910, %v1907, %v1909
        %v1942 = vsel %vm686, %v1870, 0
        %v1945 = vsel %vm686, %v1871, 0
        %v1948 = vsel %vm686, %v1872, 0
        %v1951 = vsel %vm686, %v1873, 0
        %1953 = vmatprep.subr.mxu0 0.0
        %1954 = vmatpush1.msra.mxu0 0.0
        %1955 = vmatprep.subr.mxu0 0.0
        %1956 = vmatpush1.msra.mxu0 0.0
        %1957 = vmatprep.subr.mxu0 0.0
        %1958 = vmatpush1.msra.mxu0 0.0
        %1959 = vmatprep.subr.mxu0 0.0
        %1960 = vmatpush1.msra.mxu0 0.0
        %1961 = vmatprep.subr.mxu0 0.0
        %1962 = vmatpush1.msra.mxu0 0.0
        %1963 = vmatprep.subr.mxu0 0.0
        %1964 = vmatpush1.msra.mxu0 0.0
        %1965 = vmatprep.subr.mxu0 0.0
        %1966 = vmatpush1.msra.mxu0 0.0
        %1967 = vmatprep.subr.mxu0 0.0
        %1968 = vmatpush1.msra.mxu0 0.0
        %1969 = vmatprep.subr.mxu0 0.0
        %1970 = vmatpush1.msra.mxu0 0.0
        %1971 = vmatprep.subr.mxu0 0.0
        %1972 = vmatpush1.msra.mxu0 0.0
        %1973 = vmatprep.subr.mxu0 %v1922
        %1974 = vmatpush1.msra.mxu0 %v1921
        %1975 = vmatprep.subr.mxu0 %v1920
        %1976 = vmatpush1.msra.mxu0 %v1919
        %1977 = vmatprep.subr.mxu0 %v1918
        %1978 = vmatpush1.msra.mxu0 %v1917
        %1979 = vmatprep.subr.mxu0 %v1916
        %1980 = vmatpush1.msra.mxu0 %v1915
        %1981 = vmatprep.subr.mxu0 %v1914
        %1982 = vmatpush1.msra.mxu0 %v1913
        %1983 = vmatprep.subr.mxu0 %v1912
        %1984 = vmatpush1.msra.mxu0 %v1911
        %1985 = vmatprep.subr.mxu0 0.0
        %1986 = vmatpush2.msra.mxu0 0.0
        %1987 = vmatprep.subr.mxu0 0.0
        %1988 = vmatpush2.msra.mxu0 0.0
        %1989 = vmatprep.subr.mxu0 0.0
        %1990 = vmatpush2.msra.mxu0 0.0
        %1991 = vmatprep.subr.mxu0 0.0
        %1992 = vmatpush2.msra.mxu0 0.0
        %1993 = vmatprep.subr.mxu0 0.0
        %1994 = vmatpush2.msra.mxu0 0.0
        %1995 = vmatprep.subr.mxu0 0.0
        %1996 = vmatpush2.msra.mxu0 0.0
        %1997 = vmatprep.subr.mxu0 0.0
        %1998 = vmatpush2.msra.mxu0 0.0
        %1999 = vmatprep.subr.mxu0 0.0
        %2000 = vmatpush2.msra.mxu0 0.0
        %2001 = vmatprep.subr.mxu0 0.0
        %2002 = vmatpush2.msra.mxu0 0.0
        %2003 = vmatprep.subr.mxu0 0.0
        %2004 = vmatpush2.msra.mxu0 0.0
        %2005 = vmatprep.subr.mxu0 0.0
        %2006 = vmatpush2.msra.mxu0 0.0
        %2007 = vmatprep.subr.mxu0 0.0
        %2008 = vmatpush2.msra.mxu0 0.0
        %2009 = vmatprep.subr.mxu0 0.0
        %2010 = vmatpush2.msra.mxu0 0.0
        %2011 = vmatprep.subr.mxu0 0.0
        %2012 = vmatpush2.msra.mxu0 0.0
        %2013 = vmatprep.subr.mxu0 0.0
        %2014 = vmatpush2.msra.mxu0 0.0
        %2015 = vmatprep.subr.mxu0 0.0
        %2016 = vmatpush2.msra.mxu0 0.0
        %2017 = vmatprep.mubr.f32.mxu0 0.0
        %2018 = vmatmul.mubr.f32.gmra.mxu0 %v1942
        %v2019 = vpop.f32.mrf.mxu0
        %v2020 = vadd.f32 0.0, %v2019
        %v2021 = vpop.f32.mrf.mxu0
        %v2022 = vadd.f32 0.0, %v2021
        %2023 = vmatprep.mubr.f32.mxu0 0.0
        %2024 = vmatmul.mubr.f32.gmra.mxu0 %v1945
        %v2025 = vpop.f32.mrf.mxu0
        %v2026 = vadd.f32 0.0, %v2025
        %v2027 = vpop.f32.mrf.mxu0
        %v2028 = vadd.f32 0.0, %v2027
        %2029 = vmatprep.mubr.f32.mxu0 0.0
        %2030 = vmatmul.mubr.f32.gmra.mxu0 %v1948
        %v2031 = vpop.f32.mrf.mxu0
        %v2032 = vadd.f32 0.0, %v2031
        %v2033 = vpop.f32.mrf.mxu0
        %v2034 = vadd.f32 0.0, %v2033
        %2035 = vmatprep.mubr.f32.mxu0 0.0
        %2036 = vmatmul.mubr.f32.gmra.mxu0 %v1951
        %v2037 = vpop.f32.mrf.mxu0
        %v2038 = vadd.f32 0.0, %v2037
        %v2039 = vpop.f32.mrf.mxu0
        %v2040 = vadd.f32 0.0, %v2039
        %2041 = vdwg.mxu0
        %2042 = vmatprep.subr.mxu0 0.0
        %2043 = vmatpush1.msra.mxu0 0.0
        %2044 = vmatprep.subr.mxu0 0.0
        %2045 = vmatpush1.msra.mxu0 0.0
        %2046 = vmatprep.subr.mxu0 0.0
        %2047 = vmatpush1.msra.mxu0 0.0
        %2048 = vmatprep.subr.mxu0 0.0
        %2049 = vmatpush1.msra.mxu0 0.0
        %2050 = vmatprep.subr.mxu0 0.0
        %2051 = vmatpush1.msra.mxu0 0.0
        %2052 = vmatprep.subr.mxu0 0.0
        %2053 = vmatpush1.msra.mxu0 0.0
        %2054 = vmatprep.subr.mxu0 0.0
        %2055 = vmatpush1.msra.mxu0 0.0
        %2056 = vmatprep.subr.mxu0 0.0
        %2057 = vmatpush1.msra.mxu0 0.0
        %2058 = vmatprep.subr.mxu0 0.0
        %2059 = vmatpush1.msra.mxu0 0.0
        %2060 = vmatprep.subr.mxu0 0.0
        %2061 = vmatpush1.msra.mxu0 0.0
        %2062 = vmatprep.subr.mxu0 0.0
        %2063 = vmatpush1.msra.mxu0 %v1909
        %2064 = vmatprep.subr.mxu0 0.0
        %2065 = vmatpush1.msra.mxu0 %v1903
        %2066 = vmatprep.subr.mxu0 0.0
        %2067 = vmatpush1.msra.mxu0 %v1897
        %2068 = vmatprep.subr.mxu0 0.0
        %2069 = vmatpush1.msra.mxu0 %v1891
        %2070 = vmatprep.subr.mxu0 0.0
        %2071 = vmatpush1.msra.mxu0 %v1885
        %2072 = vmatprep.subr.mxu0 0.0
        %2073 = vmatpush1.msra.mxu0 %v1879
        %2074 = vmatprep.subr.mxu0 0.0
        %2075 = vmatpush2.msra.mxu0 0.0
        %2076 = vmatprep.subr.mxu0 0.0
        %2077 = vmatpush2.msra.mxu0 0.0
        %2078 = vmatprep.subr.mxu0 0.0
        %2079 = vmatpush2.msra.mxu0 0.0
        %2080 = vmatprep.subr.mxu0 0.0
        %2081 = vmatpush2.msra.mxu0 0.0
        %2082 = vmatprep.subr.mxu0 0.0
        %2083 = vmatpush2.msra.mxu0 0.0
        %2084 = vmatprep.subr.mxu0 0.0
        %2085 = vmatpush2.msra.mxu0 0.0
        %2086 = vmatprep.subr.mxu0 0.0
        %2087 = vmatpush2.msra.mxu0 0.0
        %2088 = vmatprep.subr.mxu0 0.0
        %2089 = vmatpush2.msra.mxu0 0.0
        %2090 = vmatprep.subr.mxu0 0.0
        %2091 = vmatpush2.msra.mxu0 0.0
        %2092 = vmatprep.subr.mxu0 0.0
        %2093 = vmatpush2.msra.mxu0 0.0
        %2094 = vmatprep.subr.mxu0 0.0
        %2095 = vmatpush2.msra.mxu0 0.0
        %2096 = vmatprep.subr.mxu0 0.0
        %2097 = vmatpush2.msra.mxu0 0.0
        %2098 = vmatprep.subr.mxu0 0.0
        %2099 = vmatpush2.msra.mxu0 0.0
        %2100 = vmatprep.subr.mxu0 0.0
        %2101 = vmatpush2.msra.mxu0 0.0
        %2102 = vmatprep.subr.mxu0 0.0
        %2103 = vmatpush2.msra.mxu0 0.0
        %2104 = vmatprep.subr.mxu0 0.0
        %2105 = vmatpush2.msra.mxu0 0.0
        %2106 = vmatprep.mubr.f32.mxu0 0.0
        %2107 = vmatmul.mubr.f32.gmra.mxu0 %v1942
        %v2108 = vpop.f32.mrf.mxu0
        %v2109 = vadd.f32 0.0, %v2108
        %v2110 = vpop.f32.mrf.mxu0
        %2111 = vmatprep.mubr.f32.mxu0 0.0
        %2112 = vmatmul.mubr.f32.gmra.mxu0 %v1945
        %v2113 = vpop.f32.mrf.mxu0
        %v2114 = vadd.f32 0.0, %v2113
        %v2115 = vpop.f32.mrf.mxu0
        %2116 = vmatprep.mubr.f32.mxu0 0.0
        %2117 = vmatmul.mubr.f32.gmra.mxu0 %v1948
        %v2118 = vpop.f32.mrf.mxu0
        %v2119 = vadd.f32 0.0, %v2118
        %v2120 = vpop.f32.mrf.mxu0
        %2121 = vmatprep.mubr.f32.mxu0 0.0
        %2122 = vmatmul.mubr.f32.gmra.mxu0 %v1951
        %v2123 = vpop.f32.mrf.mxu0
        %v2124 = vadd.f32 0.0, %v2123
        %v2125 = vpop.f32.mrf.mxu0
        %2126 = vdwg.mxu0
        %v2127 = vadd.f32 %v1857, %v2020
        %v2128 = vadd.f32 %v1858, %v2022
        %v2129 = vadd.f32 %v1859, %v2109
        %v2130 = vadd.f32 %v1860, %v2026
        %v2131 = vadd.f32 %v1861, %v2028
        %v2132 = vadd.f32 %v1862, %v2114
        %v2133 = vadd.f32 %v1863, %v2032
        %v2134 = vadd.f32 %v1864, %v2034
        %v2135 = vadd.f32 %v1865, %v2119
        %v2136 = vadd.f32 %v1866, %v2038
        %v2137 = vadd.f32 %v1867, %v2040
        %v2138 = vadd.f32 %v1868, %v2124
        %s2139 = scalar_lea.vmem [#allocation3], 192
        %v2140 = vld [vmem:[%s2139] sm:$0xff]
        %v2141 = vld [vmem:[%s2139 + $0x8] sm:$0xff]
        %v2142 = vld [vmem:[%s2139 + $0x10] sm:$0xff]
        %v2143 = vld [vmem:[%s2139 + $0x18] sm:$0xff]
        %2144 = vrot.lane.b32.xlu0 %v578, 92
        %v2145 = vpop.permute.xlu0 %2144
        %2146 = vrot.lane.b32.xlu0 %v579, 92
        %v2147 = vpop.permute.xlu0 %2146
        %2148 = vrot.lane.b32.xlu0 %v580, 92
        %v2149 = vpop.permute.xlu0 %2148
        %2150 = vrot.lane.b32.xlu0 %v581, 92
        %v2151 = vpop.permute.xlu0 %2150
        %2152 = vrot.lane.b32.xlu0 %v582, 92
        %v2153 = vpop.permute.xlu0 %2152
        %2154 = vrot.lane.b32.xlu0 %v583, 92
        %v2155 = vpop.permute.xlu0 %2154
        %2156 = vrot.lane.b32.xlu0 %v584, 92
        %v2157 = vpop.permute.xlu0 %2156
        %2158 = vrot.lane.b32.xlu0 %v585, 92
        %v2159 = vpop.permute.xlu0 %2158
        %2160 = vrot.lane.b32.xlu0 %v586, 92
        %v2161 = vpop.permute.xlu0 %2160
        %2162 = vrot.lane.b32.xlu0 %v587, 92
        %v2163 = vpop.permute.xlu0 %2162
        %2164 = vrot.lane.b32.xlu0 %v588, 92
        %v2165 = vpop.permute.xlu0 %2164
        %2166 = vrot.lane.b32.xlu0 %v589, 92
        %v2167 = vpop.permute.xlu0 %2166
        %2168 = vrot.lane.b32.xlu0 %v590, 92
        %v2169 = vpop.permute.xlu0 %2168
        %2170 = vrot.lane.b32.xlu0 %v591, 92
        %v2171 = vpop.permute.xlu0 %2170
        %2172 = vrot.lane.b32.xlu0 %v592, 92
        %v2173 = vpop.permute.xlu0 %2172
        %2174 = vrot.lane.b32.xlu0 %v593, 92
        %v2175 = vpop.permute.xlu0 %2174
        %2176 = vrot.lane.b32.xlu0 %v594, 92
        %v2177 = vpop.permute.xlu0 %2176
        %2178 = vrot.lane.b32.xlu0 %v595, 92
        %v2179 = vpop.permute.xlu0 %2178
        %vm2180 = vcmask 752640
        %v2181 = vsel %vm2180, %v2145, %v2147
        %v2182 = vsel %vm2180, %v2147, %v2149
        %v2183 = vsel %vm2180, %v2151, %v2153
        %v2184 = vsel %vm2180, %v2153, %v2155
        %v2185 = vsel %vm2180, %v2157, %v2159
        %v2186 = vsel %vm2180, %v2159, %v2161
        %v2187 = vsel %vm2180, %v2163, %v2165
        %v2188 = vsel %vm2180, %v2165, %v2167
        %v2189 = vsel %vm2180, %v2169, %v2171
        %v2190 = vsel %vm2180, %v2171, %v2173
        %v2191 = vsel %vm2180, %v2175, %v2177
        %v2192 = vsel %vm2180, %v2177, %v2179
        %v2212 = vsel %vm686, %v2140, 0
        %v2215 = vsel %vm686, %v2141, 0
        %v2218 = vsel %vm686, %v2142, 0
        %v2221 = vsel %vm686, %v2143, 0
        %2223 = vmatprep.subr.mxu0 0.0
        %2224 = vmatpush1.msra.mxu0 0.0
        %2225 = vmatprep.subr.mxu0 0.0
        %2226 = vmatpush1.msra.mxu0 0.0
        %2227 = vmatprep.subr.mxu0 0.0
        %2228 = vmatpush1.msra.mxu0 0.0
        %2229 = vmatprep.subr.mxu0 0.0
        %2230 = vmatpush1.msra.mxu0 0.0
        %2231 = vmatprep.subr.mxu0 0.0
        %2232 = vmatpush1.msra.mxu0 0.0
        %2233 = vmatprep.subr.mxu0 0.0
        %2234 = vmatpush1.msra.mxu0 0.0
        %2235 = vmatprep.subr.mxu0 0.0
        %2236 = vmatpush1.msra.mxu0 0.0
        %2237 = vmatprep.subr.mxu0 0.0
        %2238 = vmatpush1.msra.mxu0 0.0
        %2239 = vmatprep.subr.mxu0 0.0
        %2240 = vmatpush1.msra.mxu0 0.0
        %2241 = vmatprep.subr.mxu0 0.0
        %2242 = vmatpush1.msra.mxu0 0.0
        %2243 = vmatprep.subr.mxu0 %v2192
        %2244 = vmatpush1.msra.mxu0 %v2191
        %2245 = vmatprep.subr.mxu0 %v2190
        %2246 = vmatpush1.msra.mxu0 %v2189
        %2247 = vmatprep.subr.mxu0 %v2188
        %2248 = vmatpush1.msra.mxu0 %v2187
        %2249 = vmatprep.subr.mxu0 %v2186
        %2250 = vmatpush1.msra.mxu0 %v2185
        %2251 = vmatprep.subr.mxu0 %v2184
        %2252 = vmatpush1.msra.mxu0 %v2183
        %2253 = vmatprep.subr.mxu0 %v2182
        %2254 = vmatpush1.msra.mxu0 %v2181
        %2255 = vmatprep.subr.mxu0 0.0
        %2256 = vmatpush2.msra.mxu0 0.0
        %2257 = vmatprep.subr.mxu0 0.0
        %2258 = vmatpush2.msra.mxu0 0.0
        %2259 = vmatprep.subr.mxu0 0.0
        %2260 = vmatpush2.msra.mxu0 0.0
        %2261 = vmatprep.subr.mxu0 0.0
        %2262 = vmatpush2.msra.mxu0 0.0
        %2263 = vmatprep.subr.mxu0 0.0
        %2264 = vmatpush2.msra.mxu0 0.0
        %2265 = vmatprep.subr.mxu0 0.0
        %2266 = vmatpush2.msra.mxu0 0.0
        %2267 = vmatprep.subr.mxu0 0.0
        %2268 = vmatpush2.msra.mxu0 0.0
        %2269 = vmatprep.subr.mxu0 0.0
        %2270 = vmatpush2.msra.mxu0 0.0
        %2271 = vmatprep.subr.mxu0 0.0
        %2272 = vmatpush2.msra.mxu0 0.0
        %2273 = vmatprep.subr.mxu0 0.0
        %2274 = vmatpush2.msra.mxu0 0.0
        %2275 = vmatprep.subr.mxu0 0.0
        %2276 = vmatpush2.msra.mxu0 0.0
        %2277 = vmatprep.subr.mxu0 0.0
        %2278 = vmatpush2.msra.mxu0 0.0
        %2279 = vmatprep.subr.mxu0 0.0
        %2280 = vmatpush2.msra.mxu0 0.0
        %2281 = vmatprep.subr.mxu0 0.0
        %2282 = vmatpush2.msra.mxu0 0.0
        %2283 = vmatprep.subr.mxu0 0.0
        %2284 = vmatpush2.msra.mxu0 0.0
        %2285 = vmatprep.subr.mxu0 0.0
        %2286 = vmatpush2.msra.mxu0 0.0
        %2287 = vmatprep.mubr.f32.mxu0 0.0
        %2288 = vmatmul.mubr.f32.gmra.mxu0 %v2212
        %v2289 = vpop.f32.mrf.mxu0
        %v2290 = vadd.f32 0.0, %v2289
        %v2291 = vpop.f32.mrf.mxu0
        %v2292 = vadd.f32 0.0, %v2291
        %2293 = vmatprep.mubr.f32.mxu0 0.0
        %2294 = vmatmul.mubr.f32.gmra.mxu0 %v2215
        %v2295 = vpop.f32.mrf.mxu0
        %v2296 = vadd.f32 0.0, %v2295
        %v2297 = vpop.f32.mrf.mxu0
        %v2298 = vadd.f32 0.0, %v2297
        %2299 = vmatprep.mubr.f32.mxu0 0.0
        %2300 = vmatmul.mubr.f32.gmra.mxu0 %v2218
        %v2301 = vpop.f32.mrf.mxu0
        %v2302 = vadd.f32 0.0, %v2301
        %v2303 = vpop.f32.mrf.mxu0
        %v2304 = vadd.f32 0.0, %v2303
        %2305 = vmatprep.mubr.f32.mxu0 0.0
        %2306 = vmatmul.mubr.f32.gmra.mxu0 %v2221
        %v2307 = vpop.f32.mrf.mxu0
        %v2308 = vadd.f32 0.0, %v2307
        %v2309 = vpop.f32.mrf.mxu0
        %v2310 = vadd.f32 0.0, %v2309
        %2311 = vdwg.mxu0
        %2312 = vmatprep.subr.mxu0 0.0
        %2313 = vmatpush1.msra.mxu0 0.0
        %2314 = vmatprep.subr.mxu0 0.0
        %2315 = vmatpush1.msra.mxu0 0.0
        %2316 = vmatprep.subr.mxu0 0.0
        %2317 = vmatpush1.msra.mxu0 0.0
        %2318 = vmatprep.subr.mxu0 0.0
        %2319 = vmatpush1.msra.mxu0 0.0
        %2320 = vmatprep.subr.mxu0 0.0
        %2321 = vmatpush1.msra.mxu0 0.0
        %2322 = vmatprep.subr.mxu0 0.0
        %2323 = vmatpush1.msra.mxu0 0.0
        %2324 = vmatprep.subr.mxu0 0.0
        %2325 = vmatpush1.msra.mxu0 0.0
        %2326 = vmatprep.subr.mxu0 0.0
        %2327 = vmatpush1.msra.mxu0 0.0
        %2328 = vmatprep.subr.mxu0 0.0
        %2329 = vmatpush1.msra.mxu0 0.0
        %2330 = vmatprep.subr.mxu0 0.0
        %2331 = vmatpush1.msra.mxu0 0.0
        %2332 = vmatprep.subr.mxu0 0.0
        %2333 = vmatpush1.msra.mxu0 %v2179
        %2334 = vmatprep.subr.mxu0 0.0
        %2335 = vmatpush1.msra.mxu0 %v2173
        %2336 = vmatprep.subr.mxu0 0.0
        %2337 = vmatpush1.msra.mxu0 %v2167
        %2338 = vmatprep.subr.mxu0 0.0
        %2339 = vmatpush1.msra.mxu0 %v2161
        %2340 = vmatprep.subr.mxu0 0.0
        %2341 = vmatpush1.msra.mxu0 %v2155
        %2342 = vmatprep.subr.mxu0 0.0
        %2343 = vmatpush1.msra.mxu0 %v2149
        %2344 = vmatprep.subr.mxu0 0.0
        %2345 = vmatpush2.msra.mxu0 0.0
        %2346 = vmatprep.subr.mxu0 0.0
        %2347 = vmatpush2.msra.mxu0 0.0
        %2348 = vmatprep.subr.mxu0 0.0
        %2349 = vmatpush2.msra.mxu0 0.0
        %2350 = vmatprep.subr.mxu0 0.0
        %2351 = vmatpush2.msra.mxu0 0.0
        %2352 = vmatprep.subr.mxu0 0.0
        %2353 = vmatpush2.msra.mxu0 0.0
        %2354 = vmatprep.subr.mxu0 0.0
        %2355 = vmatpush2.msra.mxu0 0.0
        %2356 = vmatprep.subr.mxu0 0.0
        %2357 = vmatpush2.msra.mxu0 0.0
        %2358 = vmatprep.subr.mxu0 0.0
        %2359 = vmatpush2.msra.mxu0 0.0
        %2360 = vmatprep.subr.mxu0 0.0
        %2361 = vmatpush2.msra.mxu0 0.0
        %2362 = vmatprep.subr.mxu0 0.0
        %2363 = vmatpush2.msra.mxu0 0.0
        %2364 = vmatprep.subr.mxu0 0.0
        %2365 = vmatpush2.msra.mxu0 0.0
        %2366 = vmatprep.subr.mxu0 0.0
        %2367 = vmatpush2.msra.mxu0 0.0
        %2368 = vmatprep.subr.mxu0 0.0
        %2369 = vmatpush2.msra.mxu0 0.0
        %2370 = vmatprep.subr.mxu0 0.0
        %2371 = vmatpush2.msra.mxu0 0.0
        %2372 = vmatprep.subr.mxu0 0.0
        %2373 = vmatpush2.msra.mxu0 0.0
        %2374 = vmatprep.subr.mxu0 0.0
        %2375 = vmatpush2.msra.mxu0 0.0
        %2376 = vmatprep.mubr.f32.mxu0 0.0
        %2377 = vmatmul.mubr.f32.gmra.mxu0 %v2212
        %v2378 = vpop.f32.mrf.mxu0
        %v2379 = vadd.f32 0.0, %v2378
        %v2380 = vpop.f32.mrf.mxu0
        %2381 = vmatprep.mubr.f32.mxu0 0.0
        %2382 = vmatmul.mubr.f32.gmra.mxu0 %v2215
        %v2383 = vpop.f32.mrf.mxu0
        %v2384 = vadd.f32 0.0, %v2383
        %v2385 = vpop.f32.mrf.mxu0
        %2386 = vmatprep.mubr.f32.mxu0 0.0
        %2387 = vmatmul.mubr.f32.gmra.mxu0 %v2218
        %v2388 = vpop.f32.mrf.mxu0
        %v2389 = vadd.f32 0.0, %v2388
        %v2390 = vpop.f32.mrf.mxu0
        %2391 = vmatprep.mubr.f32.mxu0 0.0
        %2392 = vmatmul.mubr.f32.gmra.mxu0 %v2221
        %v2393 = vpop.f32.mrf.mxu0
        %v2394 = vadd.f32 0.0, %v2393
        %v2395 = vpop.f32.mrf.mxu0
        %2396 = vdwg.mxu0
        %v2397 = vadd.f32 %v2127, %v2290
        %v2398 = vadd.f32 %v2128, %v2292
        %v2399 = vadd.f32 %v2129, %v2379
        %v2400 = vadd.f32 %v2130, %v2296
        %v2401 = vadd.f32 %v2131, %v2298
        %v2402 = vadd.f32 %v2132, %v2384
        %v2403 = vadd.f32 %v2133, %v2302
        %v2404 = vadd.f32 %v2134, %v2304
        %v2405 = vadd.f32 %v2135, %v2389
        %v2406 = vadd.f32 %v2136, %v2308
        %v2407 = vadd.f32 %v2137, %v2310
        %v2408 = vadd.f32 %v2138, %v2394
        %s2409 = scalar_lea.vmem [#allocation3], 224
        %v2410 = vld [vmem:[%s2409] sm:$0xff]
        %v2411 = vld [vmem:[%s2409 + $0x8] sm:$0xff]
        %v2412 = vld [vmem:[%s2409 + $0x10] sm:$0xff]
        %v2413 = vld [vmem:[%s2409 + $0x18] sm:$0xff]
        %2414 = vrot.lane.b32.xlu0 %v578, 91
        %v2415 = vpop.permute.xlu0 %2414
        %2416 = vrot.lane.b32.xlu0 %v579, 91
        %v2417 = vpop.permute.xlu0 %2416
        %2418 = vrot.lane.b32.xlu0 %v580, 91
        %v2419 = vpop.permute.xlu0 %2418
        %2420 = vrot.lane.b32.xlu0 %v581, 91
        %v2421 = vpop.permute.xlu0 %2420
        %2422 = vrot.lane.b32.xlu0 %v582, 91
        %v2423 = vpop.permute.xlu0 %2422
        %2424 = vrot.lane.b32.xlu0 %v583, 91
        %v2425 = vpop.permute.xlu0 %2424
        %2426 = vrot.lane.b32.xlu0 %v584, 91
        %v2427 = vpop.permute.xlu0 %2426
        %2428 = vrot.lane.b32.xlu0 %v585, 91
        %v2429 = vpop.permute.xlu0 %2428
        %2430 = vrot.lane.b32.xlu0 %v586, 91
        %v2431 = vpop.permute.xlu0 %2430
        %2432 = vrot.lane.b32.xlu0 %v587, 91
        %v2433 = vpop.permute.xlu0 %2432
        %2434 = vrot.lane.b32.xlu0 %v588, 91
        %v2435 = vpop.permute.xlu0 %2434
        %2436 = vrot.lane.b32.xlu0 %v589, 91
        %v2437 = vpop.permute.xlu0 %2436
        %2438 = vrot.lane.b32.xlu0 %v590, 91
        %v2439 = vpop.permute.xlu0 %2438
        %2440 = vrot.lane.b32.xlu0 %v591, 91
        %v2441 = vpop.permute.xlu0 %2440
        %2442 = vrot.lane.b32.xlu0 %v592, 91
        %v2443 = vpop.permute.xlu0 %2442
        %2444 = vrot.lane.b32.xlu0 %v593, 91
        %v2445 = vpop.permute.xlu0 %2444
        %2446 = vrot.lane.b32.xlu0 %v594, 91
        %v2447 = vpop.permute.xlu0 %2446
        %2448 = vrot.lane.b32.xlu0 %v595, 91
        %v2449 = vpop.permute.xlu0 %2448
        %vm2450 = vcmask 744448
        %v2451 = vsel %vm2450, %v2415, %v2417
        %v2452 = vsel %vm2450, %v2417, %v2419
        %v2453 = vsel %vm2450, %v2421, %v2423
        %v2454 = vsel %vm2450, %v2423, %v2425
        %v2455 = vsel %vm2450, %v2427, %v2429
        %v2456 = vsel %vm2450, %v2429, %v2431
        %v2457 = vsel %vm2450, %v2433, %v2435
        %v2458 = vsel %vm2450, %v2435, %v2437
        %v2459 = vsel %vm2450, %v2439, %v2441
        %v2460 = vsel %vm2450, %v2441, %v2443
        %v2461 = vsel %vm2450, %v2445, %v2447
        %v2462 = vsel %vm2450, %v2447, %v2449
        %v2482 = vsel %vm686, %v2410, 0
        %v2485 = vsel %vm686, %v2411, 0
        %v2488 = vsel %vm686, %v2412, 0
        %v2491 = vsel %vm686, %v2413, 0
        %2493 = vmatprep.subr.mxu0 0.0
        %2494 = vmatpush1.msra.mxu0 0.0
        %2495 = vmatprep.subr.mxu0 0.0
        %2496 = vmatpush1.msra.mxu0 0.0
        %2497 = vmatprep.subr.mxu0 0.0
        %2498 = vmatpush1.msra.mxu0 0.0
        %2499 = vmatprep.subr.mxu0 0.0
        %2500 = vmatpush1.msra.mxu0 0.0
        %2501 = vmatprep.subr.mxu0 0.0
        %2502 = vmatpush1.msra.mxu0 0.0
        %2503 = vmatprep.subr.mxu0 0.0
        %2504 = vmatpush1.msra.mxu0 0.0
        %2505 = vmatprep.subr.mxu0 0.0
        %2506 = vmatpush1.msra.mxu0 0.0
        %2507 = vmatprep.subr.mxu0 0.0
        %2508 = vmatpush1.msra.mxu0 0.0
        %2509 = vmatprep.subr.mxu0 0.0
        %2510 = vmatpush1.msra.mxu0 0.0
        %2511 = vmatprep.subr.mxu0 0.0
        %2512 = vmatpush1.msra.mxu0 0.0
        %2513 = vmatprep.subr.mxu0 %v2462
        %2514 = vmatpush1.msra.mxu0 %v2461
        %2515 = vmatprep.subr.mxu0 %v2460
        %2516 = vmatpush1.msra.mxu0 %v2459
        %2517 = vmatprep.subr.mxu0 %v2458
        %2518 = vmatpush1.msra.mxu0 %v2457
        %2519 = vmatprep.subr.mxu0 %v2456
        %2520 = vmatpush1.msra.mxu0 %v2455
        %2521 = vmatprep.subr.mxu0 %v2454
        %2522 = vmatpush1.msra.mxu0 %v2453
        %2523 = vmatprep.subr.mxu0 %v2452
        %2524 = vmatpush1.msra.mxu0 %v2451
        %2525 = vmatprep.subr.mxu0 0.0
        %2526 = vmatpush2.msra.mxu0 0.0
        %2527 = vmatprep.subr.mxu0 0.0
        %2528 = vmatpush2.msra.mxu0 0.0
        %2529 = vmatprep.subr.mxu0 0.0
        %2530 = vmatpush2.msra.mxu0 0.0
        %2531 = vmatprep.subr.mxu0 0.0
        %2532 = vmatpush2.msra.mxu0 0.0
        %2533 = vmatprep.subr.mxu0 0.0
        %2534 = vmatpush2.msra.mxu0 0.0
        %2535 = vmatprep.subr.mxu0 0.0
        %2536 = vmatpush2.msra.mxu0 0.0
        %2537 = vmatprep.subr.mxu0 0.0
        %2538 = vmatpush2.msra.mxu0 0.0
        %2539 = vmatprep.subr.mxu0 0.0
        %2540 = vmatpush2.msra.mxu0 0.0
        %2541 = vmatprep.subr.mxu0 0.0
        %2542 = vmatpush2.msra.mxu0 0.0
        %2543 = vmatprep.subr.mxu0 0.0
        %2544 = vmatpush2.msra.mxu0 0.0
        %2545 = vmatprep.subr.mxu0 0.0
        %2546 = vmatpush2.msra.mxu0 0.0
        %2547 = vmatprep.subr.mxu0 0.0
        %2548 = vmatpush2.msra.mxu0 0.0
        %2549 = vmatprep.subr.mxu0 0.0
        %2550 = vmatpush2.msra.mxu0 0.0
        %2551 = vmatprep.subr.mxu0 0.0
        %2552 = vmatpush2.msra.mxu0 0.0
        %2553 = vmatprep.subr.mxu0 0.0
        %2554 = vmatpush2.msra.mxu0 0.0
        %2555 = vmatprep.subr.mxu0 0.0
        %2556 = vmatpush2.msra.mxu0 0.0
        %2557 = vmatprep.mubr.f32.mxu0 0.0
        %2558 = vmatmul.mubr.f32.gmra.mxu0 %v2482
        %v2559 = vpop.f32.mrf.mxu0
        %v2560 = vadd.f32 0.0, %v2559
        %v2561 = vpop.f32.mrf.mxu0
        %v2562 = vadd.f32 0.0, %v2561
        %2563 = vmatprep.mubr.f32.mxu0 0.0
        %2564 = vmatmul.mubr.f32.gmra.mxu0 %v2485
        %v2565 = vpop.f32.mrf.mxu0
        %v2566 = vadd.f32 0.0, %v2565
        %v2567 = vpop.f32.mrf.mxu0
        %v2568 = vadd.f32 0.0, %v2567
        %2569 = vmatprep.mubr.f32.mxu0 0.0
        %2570 = vmatmul.mubr.f32.gmra.mxu0 %v2488
        %v2571 = vpop.f32.mrf.mxu0
        %v2572 = vadd.f32 0.0, %v2571
        %v2573 = vpop.f32.mrf.mxu0
        %v2574 = vadd.f32 0.0, %v2573
        %2575 = vmatprep.mubr.f32.mxu0 0.0
        %2576 = vmatmul.mubr.f32.gmra.mxu0 %v2491
        %v2577 = vpop.f32.mrf.mxu0
        %v2578 = vadd.f32 0.0, %v2577
        %v2579 = vpop.f32.mrf.mxu0
        %v2580 = vadd.f32 0.0, %v2579
        %2581 = vdwg.mxu0
        %2582 = vmatprep.subr.mxu0 0.0
        %2583 = vmatpush1.msra.mxu0 0.0
        %2584 = vmatprep.subr.mxu0 0.0
        %2585 = vmatpush1.msra.mxu0 0.0
        %2586 = vmatprep.subr.mxu0 0.0
        %2587 = vmatpush1.msra.mxu0 0.0
        %2588 = vmatprep.subr.mxu0 0.0
        %2589 = vmatpush1.msra.mxu0 0.0
        %2590 = vmatprep.subr.mxu0 0.0
        %2591 = vmatpush1.msra.mxu0 0.0
        %2592 = vmatprep.subr.mxu0 0.0
        %2593 = vmatpush1.msra.mxu0 0.0
        %2594 = vmatprep.subr.mxu0 0.0
        %2595 = vmatpush1.msra.mxu0 0.0
        %2596 = vmatprep.subr.mxu0 0.0
        %2597 = vmatpush1.msra.mxu0 0.0
        %2598 = vmatprep.subr.mxu0 0.0
        %2599 = vmatpush1.msra.mxu0 0.0
        %2600 = vmatprep.subr.mxu0 0.0
        %2601 = vmatpush1.msra.mxu0 0.0
        %2602 = vmatprep.subr.mxu0 0.0
        %2603 = vmatpush1.msra.mxu0 %v2449
        %2604 = vmatprep.subr.mxu0 0.0
        %2605 = vmatpush1.msra.mxu0 %v2443
        %2606 = vmatprep.subr.mxu0 0.0
        %2607 = vmatpush1.msra.mxu0 %v2437
        %2608 = vmatprep.subr.mxu0 0.0
        %2609 = vmatpush1.msra.mxu0 %v2431
        %2610 = vmatprep.subr.mxu0 0.0
        %2611 = vmatpush1.msra.mxu0 %v2425
        %2612 = vmatprep.subr.mxu0 0.0
        %2613 = vmatpush1.msra.mxu0 %v2419
        %2614 = vmatprep.subr.mxu0 0.0
        %2615 = vmatpush2.msra.mxu0 0.0
        %2616 = vmatprep.subr.mxu0 0.0
        %2617 = vmatpush2.msra.mxu0 0.0
        %2618 = vmatprep.subr.mxu0 0.0
        %2619 = vmatpush2.msra.mxu0 0.0
        %2620 = vmatprep.subr.mxu0 0.0
        %2621 = vmatpush2.msra.mxu0 0.0
        %2622 = vmatprep.subr.mxu0 0.0
        %2623 = vmatpush2.msra.mxu0 0.0
        %2624 = vmatprep.subr.mxu0 0.0
        %2625 = vmatpush2.msra.mxu0 0.0
        %2626 = vmatprep.subr.mxu0 0.0
        %2627 = vmatpush2.msra.mxu0 0.0
        %2628 = vmatprep.subr.mxu0 0.0
        %2629 = vmatpush2.msra.mxu0 0.0
        %2630 = vmatprep.subr.mxu0 0.0
        %2631 = vmatpush2.msra.mxu0 0.0
        %2632 = vmatprep.subr.mxu0 0.0
        %2633 = vmatpush2.msra.mxu0 0.0
        %2634 = vmatprep.subr.mxu0 0.0
        %2635 = vmatpush2.msra.mxu0 0.0
        %2636 = vmatprep.subr.mxu0 0.0
        %2637 = vmatpush2.msra.mxu0 0.0
        %2638 = vmatprep.subr.mxu0 0.0
        %2639 = vmatpush2.msra.mxu0 0.0
        %2640 = vmatprep.subr.mxu0 0.0
        %2641 = vmatpush2.msra.mxu0 0.0
        %2642 = vmatprep.subr.mxu0 0.0
        %2643 = vmatpush2.msra.mxu0 0.0
        %2644 = vmatprep.subr.mxu0 0.0
        %2645 = vmatpush2.msra.mxu0 0.0
        %2646 = vmatprep.mubr.f32.mxu0 0.0
        %2647 = vmatmul.mubr.f32.gmra.mxu0 %v2482
        %v2648 = vpop.f32.mrf.mxu0
        %v2649 = vadd.f32 0.0, %v2648
        %v2650 = vpop.f32.mrf.mxu0
        %2651 = vmatprep.mubr.f32.mxu0 0.0
        %2652 = vmatmul.mubr.f32.gmra.mxu0 %v2485
        %v2653 = vpop.f32.mrf.mxu0
        %v2654 = vadd.f32 0.0, %v2653
        %v2655 = vpop.f32.mrf.mxu0
        %2656 = vmatprep.mubr.f32.mxu0 0.0
        %2657 = vmatmul.mubr.f32.gmra.mxu0 %v2488
        %v2658 = vpop.f32.mrf.mxu0
        %v2659 = vadd.f32 0.0, %v2658
        %v2660 = vpop.f32.mrf.mxu0
        %2661 = vmatprep.mubr.f32.mxu0 0.0
        %2662 = vmatmul.mubr.f32.gmra.mxu0 %v2491
        %v2663 = vpop.f32.mrf.mxu0
        %v2664 = vadd.f32 0.0, %v2663
        %v2665 = vpop.f32.mrf.mxu0
        %2666 = vdwg.mxu0
        %v2667 = vadd.f32 %v2397, %v2560
        %v2668 = vadd.f32 %v2398, %v2562
        %v2669 = vadd.f32 %v2399, %v2649
        %v2670 = vadd.f32 %v2400, %v2566
        %v2671 = vadd.f32 %v2401, %v2568
        %v2672 = vadd.f32 %v2402, %v2654
        %v2673 = vadd.f32 %v2403, %v2572
        %v2674 = vadd.f32 %v2404, %v2574
        %v2675 = vadd.f32 %v2405, %v2659
        %v2676 = vadd.f32 %v2406, %v2578
        %v2677 = vadd.f32 %v2407, %v2580
        %v2678 = vadd.f32 %v2408, %v2664
        %s2679 = scalar_lea.vmem [#allocation3], 256
        %v2680 = vld [vmem:[%s2679] sm:$0xff]
        %v2681 = vld [vmem:[%s2679 + $0x8] sm:$0xff]
        %v2682 = vld [vmem:[%s2679 + $0x10] sm:$0xff]
        %v2683 = vld [vmem:[%s2679 + $0x18] sm:$0xff]
        %2684 = vrot.lane.b32.xlu0 %v578, 90
        %v2685 = vpop.permute.xlu0 %2684
        %2686 = vrot.lane.b32.xlu0 %v579, 90
        %v2687 = vpop.permute.xlu0 %2686
        %2688 = vrot.lane.b32.xlu0 %v580, 90
        %v2689 = vpop.permute.xlu0 %2688
        %2690 = vrot.lane.b32.xlu0 %v581, 90
        %v2691 = vpop.permute.xlu0 %2690
        %2692 = vrot.lane.b32.xlu0 %v582, 90
        %v2693 = vpop.permute.xlu0 %2692
        %2694 = vrot.lane.b32.xlu0 %v583, 90
        %v2695 = vpop.permute.xlu0 %2694
        %2696 = vrot.lane.b32.xlu0 %v584, 90
        %v2697 = vpop.permute.xlu0 %2696
        %2698 = vrot.lane.b32.xlu0 %v585, 90
        %v2699 = vpop.permute.xlu0 %2698
        %2700 = vrot.lane.b32.xlu0 %v586, 90
        %v2701 = vpop.permute.xlu0 %2700
        %2702 = vrot.lane.b32.xlu0 %v587, 90
        %v2703 = vpop.permute.xlu0 %2702
        %2704 = vrot.lane.b32.xlu0 %v588, 90
        %v2705 = vpop.permute.xlu0 %2704
        %2706 = vrot.lane.b32.xlu0 %v589, 90
        %v2707 = vpop.permute.xlu0 %2706
        %2708 = vrot.lane.b32.xlu0 %v590, 90
        %v2709 = vpop.permute.xlu0 %2708
        %2710 = vrot.lane.b32.xlu0 %v591, 90
        %v2711 = vpop.permute.xlu0 %2710
        %2712 = vrot.lane.b32.xlu0 %v592, 90
        %v2713 = vpop.permute.xlu0 %2712
        %2714 = vrot.lane.b32.xlu0 %v593, 90
        %v2715 = vpop.permute.xlu0 %2714
        %2716 = vrot.lane.b32.xlu0 %v594, 90
        %v2717 = vpop.permute.xlu0 %2716
        %2718 = vrot.lane.b32.xlu0 %v595, 90
        %v2719 = vpop.permute.xlu0 %2718
        %vm2720 = vcmask 736256
        %v2721 = vsel %vm2720, %v2685, %v2687
        %v2722 = vsel %vm2720, %v2687, %v2689
        %v2723 = vsel %vm2720, %v2691, %v2693
        %v2724 = vsel %vm2720, %v2693, %v2695
        %v2725 = vsel %vm2720, %v2697, %v2699
        %v2726 = vsel %vm2720, %v2699, %v2701
        %v2727 = vsel %vm2720, %v2703, %v2705
        %v2728 = vsel %vm2720, %v2705, %v2707
        %v2729 = vsel %vm2720, %v2709, %v2711
        %v2730 = vsel %vm2720, %v2711, %v2713
        %v2731 = vsel %vm2720, %v2715, %v2717
        %v2732 = vsel %vm2720, %v2717, %v2719
        %v2752 = vsel %vm686, %v2680, 0
        %v2755 = vsel %vm686, %v2681, 0
        %v2758 = vsel %vm686, %v2682, 0
        %v2761 = vsel %vm686, %v2683, 0
        %2763 = vmatprep.subr.mxu0 0.0
        %2764 = vmatpush1.msra.mxu0 0.0
        %2765 = vmatprep.subr.mxu0 0.0
        %2766 = vmatpush1.msra.mxu0 0.0
        %2767 = vmatprep.subr.mxu0 0.0
        %2768 = vmatpush1.msra.mxu0 0.0
        %2769 = vmatprep.subr.mxu0 0.0
        %2770 = vmatpush1.msra.mxu0 0.0
        %2771 = vmatprep.subr.mxu0 0.0
        %2772 = vmatpush1.msra.mxu0 0.0
        %2773 = vmatprep.subr.mxu0 0.0
        %2774 = vmatpush1.msra.mxu0 0.0
        %2775 = vmatprep.subr.mxu0 0.0
        %2776 = vmatpush1.msra.mxu0 0.0
        %2777 = vmatprep.subr.mxu0 0.0
        %2778 = vmatpush1.msra.mxu0 0.0
        %2779 = vmatprep.subr.mxu0 0.0
        %2780 = vmatpush1.msra.mxu0 0.0
        %2781 = vmatprep.subr.mxu0 0.0
        %2782 = vmatpush1.msra.mxu0 0.0
        %2783 = vmatprep.subr.mxu0 %v2732
        %2784 = vmatpush1.msra.mxu0 %v2731
        %2785 = vmatprep.subr.mxu0 %v2730
        %2786 = vmatpush1.msra.mxu0 %v2729
        %2787 = vmatprep.subr.mxu0 %v2728
        %2788 = vmatpush1.msra.mxu0 %v2727
        %2789 = vmatprep.subr.mxu0 %v2726
        %2790 = vmatpush1.msra.mxu0 %v2725
        %2791 = vmatprep.subr.mxu0 %v2724
        %2792 = vmatpush1.msra.mxu0 %v2723
        %2793 = vmatprep.subr.mxu0 %v2722
        %2794 = vmatpush1.msra.mxu0 %v2721
        %2795 = vmatprep.subr.mxu0 0.0
        %2796 = vmatpush2.msra.mxu0 0.0
        %2797 = vmatprep.subr.mxu0 0.0
        %2798 = vmatpush2.msra.mxu0 0.0
        %2799 = vmatprep.subr.mxu0 0.0
        %2800 = vmatpush2.msra.mxu0 0.0
        %2801 = vmatprep.subr.mxu0 0.0
        %2802 = vmatpush2.msra.mxu0 0.0
        %2803 = vmatprep.subr.mxu0 0.0
        %2804 = vmatpush2.msra.mxu0 0.0
        %2805 = vmatprep.subr.mxu0 0.0
        %2806 = vmatpush2.msra.mxu0 0.0
        %2807 = vmatprep.subr.mxu0 0.0
        %2808 = vmatpush2.msra.mxu0 0.0
        %2809 = vmatprep.subr.mxu0 0.0
        %2810 = vmatpush2.msra.mxu0 0.0
        %2811 = vmatprep.subr.mxu0 0.0
        %2812 = vmatpush2.msra.mxu0 0.0
        %2813 = vmatprep.subr.mxu0 0.0
        %2814 = vmatpush2.msra.mxu0 0.0
        %2815 = vmatprep.subr.mxu0 0.0
        %2816 = vmatpush2.msra.mxu0 0.0
        %2817 = vmatprep.subr.mxu0 0.0
        %2818 = vmatpush2.msra.mxu0 0.0
        %2819 = vmatprep.subr.mxu0 0.0
        %2820 = vmatpush2.msra.mxu0 0.0
        %2821 = vmatprep.subr.mxu0 0.0
        %2822 = vmatpush2.msra.mxu0 0.0
        %2823 = vmatprep.subr.mxu0 0.0
        %2824 = vmatpush2.msra.mxu0 0.0
        %2825 = vmatprep.subr.mxu0 0.0
        %2826 = vmatpush2.msra.mxu0 0.0
        %2827 = vmatprep.mubr.f32.mxu0 0.0
        %2828 = vmatmul.mubr.f32.gmra.mxu0 %v2752
        %v2829 = vpop.f32.mrf.mxu0
        %v2830 = vadd.f32 0.0, %v2829
        %v2831 = vpop.f32.mrf.mxu0
        %v2832 = vadd.f32 0.0, %v2831
        %2833 = vmatprep.mubr.f32.mxu0 0.0
        %2834 = vmatmul.mubr.f32.gmra.mxu0 %v2755
        %v2835 = vpop.f32.mrf.mxu0
        %v2836 = vadd.f32 0.0, %v2835
        %v2837 = vpop.f32.mrf.mxu0
        %v2838 = vadd.f32 0.0, %v2837
        %2839 = vmatprep.mubr.f32.mxu0 0.0
        %2840 = vmatmul.mubr.f32.gmra.mxu0 %v2758
        %v2841 = vpop.f32.mrf.mxu0
        %v2842 = vadd.f32 0.0, %v2841
        %v2843 = vpop.f32.mrf.mxu0
        %v2844 = vadd.f32 0.0, %v2843
        %2845 = vmatprep.mubr.f32.mxu0 0.0
        %2846 = vmatmul.mubr.f32.gmra.mxu0 %v2761
        %v2847 = vpop.f32.mrf.mxu0
        %v2848 = vadd.f32 0.0, %v2847
        %v2849 = vpop.f32.mrf.mxu0
        %v2850 = vadd.f32 0.0, %v2849
        %2851 = vdwg.mxu0
        %2852 = vmatprep.subr.mxu0 0.0
        %2853 = vmatpush1.msra.mxu0 0.0
        %2854 = vmatprep.subr.mxu0 0.0
        %2855 = vmatpush1.msra.mxu0 0.0
        %2856 = vmatprep.subr.mxu0 0.0
        %2857 = vmatpush1.msra.mxu0 0.0
        %2858 = vmatprep.subr.mxu0 0.0
        %2859 = vmatpush1.msra.mxu0 0.0
        %2860 = vmatprep.subr.mxu0 0.0
        %2861 = vmatpush1.msra.mxu0 0.0
        %2862 = vmatprep.subr.mxu0 0.0
        %2863 = vmatpush1.msra.mxu0 0.0
        %2864 = vmatprep.subr.mxu0 0.0
        %2865 = vmatpush1.msra.mxu0 0.0
        %2866 = vmatprep.subr.mxu0 0.0
        %2867 = vmatpush1.msra.mxu0 0.0
        %2868 = vmatprep.subr.mxu0 0.0
        %2869 = vmatpush1.msra.mxu0 0.0
        %2870 = vmatprep.subr.mxu0 0.0
        %2871 = vmatpush1.msra.mxu0 0.0
        %2872 = vmatprep.subr.mxu0 0.0
        %2873 = vmatpush1.msra.mxu0 %v2719
        %2874 = vmatprep.subr.mxu0 0.0
        %2875 = vmatpush1.msra.mxu0 %v2713
        %2876 = vmatprep.subr.mxu0 0.0
        %2877 = vmatpush1.msra.mxu0 %v2707
        %2878 = vmatprep.subr.mxu0 0.0
        %2879 = vmatpush1.msra.mxu0 %v2701
        %2880 = vmatprep.subr.mxu0 0.0
        %2881 = vmatpush1.msra.mxu0 %v2695
        %2882 = vmatprep.subr.mxu0 0.0
        %2883 = vmatpush1.msra.mxu0 %v2689
        %2884 = vmatprep.subr.mxu0 0.0
        %2885 = vmatpush2.msra.mxu0 0.0
        %2886 = vmatprep.subr.mxu0 0.0
        %2887 = vmatpush2.msra.mxu0 0.0
        %2888 = vmatprep.subr.mxu0 0.0
        %2889 = vmatpush2.msra.mxu0 0.0
        %2890 = vmatprep.subr.mxu0 0.0
        %2891 = vmatpush2.msra.mxu0 0.0
        %2892 = vmatprep.subr.mxu0 0.0
        %2893 = vmatpush2.msra.mxu0 0.0
        %2894 = vmatprep.subr.mxu0 0.0
        %2895 = vmatpush2.msra.mxu0 0.0
        %2896 = vmatprep.subr.mxu0 0.0
        %2897 = vmatpush2.msra.mxu0 0.0
        %2898 = vmatprep.subr.mxu0 0.0
        %2899 = vmatpush2.msra.mxu0 0.0
        %2900 = vmatprep.subr.mxu0 0.0
        %2901 = vmatpush2.msra.mxu0 0.0
        %2902 = vmatprep.subr.mxu0 0.0
        %2903 = vmatpush2.msra.mxu0 0.0
        %2904 = vmatprep.subr.mxu0 0.0
        %2905 = vmatpush2.msra.mxu0 0.0
        %2906 = vmatprep.subr.mxu0 0.0
        %2907 = vmatpush2.msra.mxu0 0.0
        %2908 = vmatprep.subr.mxu0 0.0
        %2909 = vmatpush2.msra.mxu0 0.0
        %2910 = vmatprep.subr.mxu0 0.0
        %2911 = vmatpush2.msra.mxu0 0.0
        %2912 = vmatprep.subr.mxu0 0.0
        %2913 = vmatpush2.msra.mxu0 0.0
        %2914 = vmatprep.subr.mxu0 0.0
        %2915 = vmatpush2.msra.mxu0 0.0
        %2916 = vmatprep.mubr.f32.mxu0 0.0
        %2917 = vmatmul.mubr.f32.gmra.mxu0 %v2752
        %v2918 = vpop.f32.mrf.mxu0
        %v2919 = vadd.f32 0.0, %v2918
        %v2920 = vpop.f32.mrf.mxu0
        %2921 = vmatprep.mubr.f32.mxu0 0.0
        %2922 = vmatmul.mubr.f32.gmra.mxu0 %v2755
        %v2923 = vpop.f32.mrf.mxu0
        %v2924 = vadd.f32 0.0, %v2923
        %v2925 = vpop.f32.mrf.mxu0
        %2926 = vmatprep.mubr.f32.mxu0 0.0
        %2927 = vmatmul.mubr.f32.gmra.mxu0 %v2758
        %v2928 = vpop.f32.mrf.mxu0
        %v2929 = vadd.f32 0.0, %v2928
        %v2930 = vpop.f32.mrf.mxu0
        %2931 = vmatprep.mubr.f32.mxu0 0.0
        %2932 = vmatmul.mubr.f32.gmra.mxu0 %v2761
        %v2933 = vpop.f32.mrf.mxu0
        %v2934 = vadd.f32 0.0, %v2933
        %v2935 = vpop.f32.mrf.mxu0
        %2936 = vdwg.mxu0
        %v2937 = vadd.f32 %v2667, %v2830
        %v2938 = vadd.f32 %v2668, %v2832
        %v2939 = vadd.f32 %v2669, %v2919
        %v2940 = vadd.f32 %v2670, %v2836
        %v2941 = vadd.f32 %v2671, %v2838
        %v2942 = vadd.f32 %v2672, %v2924
        %v2943 = vadd.f32 %v2673, %v2842
        %v2944 = vadd.f32 %v2674, %v2844
        %v2945 = vadd.f32 %v2675, %v2929
        %v2946 = vadd.f32 %v2676, %v2848
        %v2947 = vadd.f32 %v2677, %v2850
        %v2948 = vadd.f32 %v2678, %v2934
        %v2949 = vld [vmem:[%s3] sm:$0xff]
        %v2950 = vld [vmem:[%s3 + $0x8] sm:$0xff]
        %v2951 = vld [vmem:[%s3 + $0x10] sm:$0xff]
        %v2952 = vld [vmem:[%s3 + $0x18] sm:$0xff]
        %2954 = vset.pattern.permute.xlu0 0
        %2955 = vperm.xlu0 %2954, %v2949
        %v2956 = vpop.permute.xlu0 %2955
        %2959 = vset.pattern.permute.xlu0 0
        %2960 = vperm.xlu0 %2959, %v2950
        %v2961 = vpop.permute.xlu0 %2960
        %2964 = vset.pattern.permute.xlu0 0
        %2965 = vperm.xlu0 %2964, %v2951
        %v2966 = vpop.permute.xlu0 %2965
        %2969 = vset.pattern.permute.xlu0 0
        %2970 = vperm.xlu0 %2969, %v2952
        %v2971 = vpop.permute.xlu0 %2970
        %v2973 = vadd.f32 %v2937, %v2956
        %v2974 = vadd.f32 %v2938, %v2956
        %v2975 = vadd.f32 %v2939, %v2956
        %v2976 = vadd.f32 %v2940, %v2961
        %v2977 = vadd.f32 %v2941, %v2961
        %v2978 = vadd.f32 %v2942, %v2961
        %v2979 = vadd.f32 %v2943, %v2966
        %v2980 = vadd.f32 %v2944, %v2966
        %v2981 = vadd.f32 %v2945, %v2966
        %v2982 = vadd.f32 %v2946, %v2971
        %v2983 = vadd.f32 %v2947, %v2971
        %v2984 = vadd.f32 %v2948, %v2971
        %2985 = vst [vmem:[%s205] sm:$0xff] %v2973
        %2986 = vst [vmem:[%s205 + $0x8] sm:$0xff] %v2974
        %vm2987 = vcmask 261120
        %2988 = vst.msk [vmem:[%s205 + $0x10] sm:$0xff] %vm2987, %v2975
        %2989 = vst [vmem:[%s205 + $0x18] sm:$0xff] %v2976
        %2990 = vst [vmem:[%s205 + $0x20] sm:$0xff] %v2977
        %2991 = vst.msk [vmem:[%s205 + $0x28] sm:$0xff] %vm2987, %v2978
        %2992 = vst [vmem:[%s205 + $0x30] sm:$0xff] %v2979
        %2993 = vst [vmem:[%s205 + $0x38] sm:$0xff] %v2980
        %2994 = vst.msk [vmem:[%s205 + $0x40] sm:$0xff] %vm2987, %v2981
        %2995 = vst [vmem:[%s205 + $0x48] sm:$0xff] %v2982
        %2996 = vst [vmem:[%s205 + $0x50] sm:$0xff] %v2983
        %2997 = vst.msk [vmem:[%s205 + $0x58] sm:$0xff] %vm2987, %v2984
        %s2998 = sand.u32 %s116, 1
        %s2999 = scalar_lea.sflag [#allocation5], %s2998
        %s3000 = sand.u32 %s116, 1
        %s3001 = smul.addr %s3000, 96
        %s3002 = scalar_lea.vmem [#allocation6], %s3001
        // Predicated region
        $region41: #{tpu_custom_call.1} parent=35 // pred_check
          %p3003 = pneg %p126
        $region42: #{tpu_custom_call.1} parent=35 // pred_check_branch
          %3005 = sbr.rel (%p3003) target = $region44
        $region43: #{tpu_custom_call.1} parent=35 // pred_region
          %s3007 = ssub.s32 1536, 1536
          %3008 = vsyncadd %s2999, %s3007
          %s3009 = smul.addr %s19, 12
          %s3010 = smul.addr %s3009, 128
          %s3011 = scalar_lea.hbm %s4, %s3010
          %s3012 = sshll.u32 %s3002, 4
          %s3013 = int_to_ptr.vmem [resolvable:$true] %s3012
          %3018 = dma.vmem_to_hbm [thread:$0]  %s3013, 1536, %s3011, %s2999, 384, 384, 24
        $region44: #{tpu_custom_call.1} parent=35 // pred_fallthru
          _
      $region36: #{tpu_custom_call.1} parent=5 // pred_fallthru
        _
      %p3019 = scmp.le.s32.totalorder 2, %s14
      // Predicated region
      $region45: #{tpu_custom_call.1} parent=5 // pred_check
        %p3020 = pneg %p3019
      $region46: #{tpu_custom_call.1} parent=5 // pred_check_branch
        %3022 = sbr.rel (%p3020) target = $region48
      $region47: #{tpu_custom_call.1} parent=5 // pred_region
        %s3023 = ssub.s32 %s14, 2
        // Predicated region
        $region49: #{tpu_custom_call.1} parent=47 // pred_check
          %p3024 = pneg %p132
        $region50: #{tpu_custom_call.1} parent=47 // pred_check_branch
          %3026 = sbr.rel (%p3024) target = $region52
        $region51: #{tpu_custom_call.1} parent=47 // pred_region
          %s3027 = sand.u32 %s117, 1
          %s3028 = scalar_lea.sflag [#allocation5], %s3027
          %s3029 = sand.u32 %s117, 1
          %s3030 = smul.addr %s3029, 96
          %s3031 = scalar_lea.vmem [#allocation6], %s3030
          %3032 = dma.done %s3028, 1536
        $region52: #{tpu_custom_call.1} parent=47 // pred_fallthru
          _
      $region48: #{tpu_custom_call.1} parent=5 // pred_fallthru
        _
    $region6: #{tpu_custom_call.1} parent=1 // loop_footer
      %s18 = sadd.s32 1, %s14
    $region7: #{tpu_custom_call.1} parent=1 // loop_footer_branch
      %13 = sbr.rel target = $region3
    $region8: #{tpu_custom_call.1} parent=1 // loop_exit
      _
    %3033 = vsyncpa [#allocation4], 1
    %s3034 = scalar_lea.sflag [#allocation4], 1
    %3035 = vsyncpa %s3034, 1
    %3036 = vsyncpa [#allocation5], 1
    %s3037 = scalar_lea.sflag [#allocation5], 1
    %3038 = vsyncpa %s3037, 1

</llo_original>
